<compile_context>
chip_gen: v6e
topology: v6e:2x2x1
jax: 0.10.0
libtpu: 0.0.40
codegen_flags: <defaults>
</compile_context>

<pallas_src>
import jax
import jax.numpy as jnp
from jax.experimental import pallas as pl
from jax.experimental.pallas import tpu as pltpu

# Padded / packed layout constants.
H1 = 384              # 350 -> 384 (lane aligned)
H2 = 384              # 350 -> 384
H3 = 128              # already aligned
OUT_PAD = 128         # fc4 output padded 1 -> 128 (only column 0 nonzero)
BIAS_W = H1 + H2 + H3  # 896, lane aligned (7 * 128)
B1_OFF = 0
B2_OFF = H1            # 384 (multiple of 128)
B3_OFF = H1 + H2       # 768 (multiple of 128)


def _round_up(n, m):
    return pl.cdiv(n, m) * m


def dnn_kernel(x_ref, w1_ref, w2_ref, w3_ref, w4_ref, bias_ref, o_ref):
    x = x_ref[...]                                    # (TB, D_PAD) bf16

    b1 = bias_ref[:, B1_OFF:B1_OFF + H1]              # (1, 384) f32, lane-aligned
    b2 = bias_ref[:, B2_OFF:B2_OFF + H2]              # (1, 384) f32
    b3 = bias_ref[:, B3_OFF:B3_OFF + H3]              # (1, 128) f32

    # fc1 + relu (bf16 MXU inputs, f32 accumulation)
    h1 = jnp.dot(x, w1_ref[...], preferred_element_type=jnp.float32) + b1
    h1 = jnp.maximum(h1, 0.0).astype(jnp.bfloat16)

    # dropout(p=0.5) -> identity in eval mode (see TODO at top of file).

    # fc2 + relu
    h2 = jnp.dot(h1, w2_ref[...], preferred_element_type=jnp.float32) + b2
    h2 = jnp.maximum(h2, 0.0).astype(jnp.bfloat16)

    # fc3 + relu
    h3 = jnp.dot(h2, w3_ref[...], preferred_element_type=jnp.float32) + b3
    h3 = jnp.maximum(h3, 0.0).astype(jnp.bfloat16)    # (TB, 128)

    # fc4: normal MXU matmul against zero-padded (128, 128) W4 -> lane-dense
    # unmasked (TB, 128) stores.  Only column 0 carries the real output;
    # b4 is added in the wrapper.
    out = jnp.dot(h3, w4_ref[...], preferred_element_type=jnp.float32)
    o_ref[...] = out.astype(o_ref.dtype)


def choose_batch_tile(batch, tb_max=1024):
    """MXU-aligned batch tile: as large as possible to amortize per-step
    pipeline overhead, but capped so the grid keeps >=2 steps when the batch
    allows it (so v7x's two TensorCores both get work)."""
    tb = 256
    while tb * 2 <= tb_max and pl.cdiv(batch, tb * 2) >= 2:
        tb *= 2
    return tb


def dnn_forward(x, prepared, *, tb=None):
    """x: (B, input_dim) float32; prepared: output of prepare_params()."""
    B, d = x.shape
    if tb is None:
        tb = choose_batch_tile(B)
    b_pad = _round_up(B, tb)
    d_pad = prepared["w1"].shape[0]                   # bf16-sublane aligned

    # Zero-pad batch/feature dims, cast to bf16 for the MXU.
    x_p = jnp.zeros((b_pad, d_pad), jnp.bfloat16)
    x_p = x_p.at[:B, :d].set(x.astype(jnp.bfloat16))

    w1, w2, w3, w4, bias = (prepared[k] for k in ("w1", "w2", "w3", "w4", "bias"))

    compiler_kwargs = dict(dimension_semantics=("parallel",))
    if tb >= 2048:
        # v5e default scoped-VMEM limit is 16 MiB; f32 intermediates at large
        # TB can exceed it even though physical VMEM is fine.
        compiler_kwargs["vmem_limit_bytes"] = 64 << 20

    out = pl.pallas_call(
        dnn_kernel,
        out_shape=jax.ShapeDtypeStruct((b_pad, OUT_PAD), jnp.float32),
        grid_spec=pltpu.PrefetchScalarGridSpec(
            num_scalar_prefetch=0,
            grid=(b_pad // tb,),
            in_specs=[
                pl.BlockSpec((tb, d_pad), lambda i: (i, 0)),       # x tile
                pl.BlockSpec((d_pad, H1), lambda i: (0, 0)),       # W1 (resident)
                pl.BlockSpec((H1, H2), lambda i: (0, 0)),          # W2 (resident)
                pl.BlockSpec((H2, H3), lambda i: (0, 0)),          # W3 (resident)
                pl.BlockSpec((H3, OUT_PAD), lambda i: (0, 0)),     # W4 padded (resident)
                pl.BlockSpec((1, BIAS_W), lambda i: (0, 0)),       # packed b1..b3
            ],
            out_specs=pl.BlockSpec((tb, OUT_PAD), lambda i: (i, 0)),
        ),
        compiler_params=pltpu.CompilerParams(**compiler_kwargs),
    )(x_p, w1, w2, w3, w4, bias)

    # Column 0 holds the real fc4 output; add b4 here (wrapper-side, free).
    return out[:B, :1] + prepared["b4"]


def init_params(key, input_dim):
    """PyTorch-like nn.Linear init; weights stored as (in, out) = W_torch.T."""
    dims = [(input_dim, 350), (350, 350), (350, 128), (128, 1)]
    params = {}
    for i, (fan_in, fan_out) in enumerate(dims, start=1):
        key, kw, kb = jax.random.split(key, 3)
        bound = 1.0 / jnp.sqrt(fan_in)
        params[f"w{i}"] = jax.random.uniform(
            kw, (fan_in, fan_out), jnp.float32, -bound, bound)
        params[f"b{i}"] = jax.random.uniform(
            kb, (1, fan_out), jnp.float32, -bound, bound)
    return params


def prepare_params(params):
    """Zero-pad to aligned shapes, cast weights to bf16, pack b1..b3."""
    def pad2(w, rows, cols):
        return jnp.zeros((rows, cols), w.dtype).at[:w.shape[0], :w.shape[1]].set(w)

    d = params["w1"].shape[0]
    d_pad = _round_up(d, 16)                           # bf16 sublane multiple

    prepared = {
        "w1": pad2(params["w1"], d_pad, H1).astype(jnp.bfloat16),
        "w2": pad2(params["w2"], H1, H2).astype(jnp.bfloat16),
        "w3": pad2(params["w3"], H2, H3).astype(jnp.bfloat16),
        # W4 padded to (128, 128), only column 0 nonzero -> normal MXU shape.
        "w4": pad2(params["w4"], H3, OUT_PAD).astype(jnp.bfloat16),
        "b4": params["b4"],                            # (1, 1) f32, added in wrapper
    }
    bias = jnp.zeros((1, BIAS_W), jnp.float32)
    bias = bias.at[:, B1_OFF:B1_OFF + params["b1"].shape[1]].set(params["b1"])
    bias = bias.at[:, B2_OFF:B2_OFF + params["b2"].shape[1]].set(params["b2"])
    bias = bias.at[:, B3_OFF:B3_OFF + params["b3"].shape[1]].set(params["b3"])
    prepared["bias"] = bias
    return prepared


def dnn_reference_f32(x, params):
    h = jnp.maximum(x @ params["w1"] + params["b1"], 0.0)
    h = jnp.maximum(h @ params["w2"] + params["b2"], 0.0)
    h = jnp.maximum(h @ params["w3"] + params["b3"], 0.0)
    return h @ params["w4"] + params["b4"]


def dnn_reference_matched(x, params):
    """Mirrors kernel numerics: bf16 matmul inputs, f32 accumulation."""
    bf = jnp.bfloat16
    f32 = jnp.float32
    h = jnp.maximum(jnp.dot(x.astype(bf), params["w1"].astype(bf),
                            preferred_element_type=f32) + params["b1"], 0.0)
    h = jnp.maximum(jnp.dot(h.astype(bf), params["w2"].astype(bf),
                            preferred_element_type=f32) + params["b2"], 0.0)
    h = jnp.maximum(jnp.dot(h.astype(bf), params["w3"].astype(bf),
                            preferred_element_type=f32) + params["b3"], 0.0)
    return jnp.dot(h.astype(bf), params["w4"].astype(bf),
                   preferred_element_type=f32) + params["b4"]


if __name__ == "__main__":
    key = jax.random.PRNGKey(0)
    input_dim = 32
    batch = 8

    kx, kp = jax.random.split(key)
    x = jax.random.normal(kx, (batch, input_dim), jnp.float32)
    params = init_params(kp, input_dim)
    prepared = prepare_params(params)

    out = dnn_forward(x, prepared)
    out = jax.block_until_ready(out)
    assert out.shape == (batch, 1)

    # Tight check against a reference that mirrors the kernel's bf16/f32 numerics.
    ref_matched = dnn_reference_matched(x, params)
    assert jnp.allclose(out, ref_matched, atol=2e-3, rtol=2e-3), (
        "mismatch vs bf16-matched reference")

    # Loose sanity check against the pure-f32 PyTorch-equivalent forward.
    ref_f32 = dnn_reference_f32(x, params)
    assert jnp.allclose(out, ref_f32, atol=5e-2, rtol=5e-2), (
        "mismatch vs f32 reference")

    print("KERNEL_OK")
</pallas_src>

<mosaic_0001>
module attributes {stable_mosaic.version = 11 : i64} {
  func.func @dnn_kernel(%arg0: i32, %arg1: memref<256x32xbf16, #tpu.memory_space<vmem>>, %arg2: memref<32x384xbf16, #tpu.memory_space<vmem>>, %arg3: memref<384x384xbf16, #tpu.memory_space<vmem>>, %arg4: memref<384x128xbf16, #tpu.memory_space<vmem>>, %arg5: memref<128x128xbf16, #tpu.memory_space<vmem>>, %arg6: memref<1x896xf32, #tpu.memory_space<vmem>>, %arg7: memref<256x128xf32, #tpu.memory_space<vmem>>) attributes {dimension_semantics = [#tpu.dimension_semantics<parallel>], iteration_bounds = array<i64: 1>, scalar_prefetch = 0 : i64, scratch_operands = 0 : i64, tpu.core_type = #tpu.core_type<tc>, window_params = [{transform_indices = @transform_0, window_bounds = array<i64: 256, 32>}, {pipeline_mode = #tpu.pipeline_mode<synchronous>, transform_indices = @transform_1, window_bounds = array<i64: 32, 384>}, {pipeline_mode = #tpu.pipeline_mode<synchronous>, transform_indices = @transform_2, window_bounds = array<i64: 384, 384>}, {pipeline_mode = #tpu.pipeline_mode<synchronous>, transform_indices = @transform_3, window_bounds = array<i64: 384, 128>}, {pipeline_mode = #tpu.pipeline_mode<synchronous>, transform_indices = @transform_4, window_bounds = array<i64: 128, 128>}, {pipeline_mode = #tpu.pipeline_mode<synchronous>, transform_indices = @transform_5, window_bounds = array<i64: 1, 896>}, {transform_indices = @transform_6, window_bounds = array<i64: 256, 128>}]} {
    %c0 = arith.constant 0 : index
    %c0_0 = arith.constant 0 : index
    %0 = vector.load %arg1[%c0, %c0_0] : memref<256x32xbf16, #tpu.memory_space<vmem>>, vector<256x32xbf16>
    %c0_1 = arith.constant 0 : index
    %c0_2 = arith.constant 0 : index
    %1 = vector.load %arg6[%c0_1, %c0_2] : memref<1x896xf32, #tpu.memory_space<vmem>>, vector<1x384xf32>
    %c0_3 = arith.constant 0 : index
    %c384 = arith.constant 384 : index
    %2 = vector.load %arg6[%c0_3, %c384] : memref<1x896xf32, #tpu.memory_space<vmem>>, vector<1x384xf32>
    %c0_4 = arith.constant 0 : index
    %c768 = arith.constant 768 : index
    %3 = vector.load %arg6[%c0_4, %c768] : memref<1x896xf32, #tpu.memory_space<vmem>>, vector<1x128xf32>
    %c0_5 = arith.constant 0 : index
    %c0_6 = arith.constant 0 : index
    %4 = vector.load %arg2[%c0_5, %c0_6] : memref<32x384xbf16, #tpu.memory_space<vmem>>, vector<32x384xbf16>
    %cst = arith.constant dense<0.000000e+00> : vector<256x384xf32>
    %5 = tpu.matmul %0, %4, %cst {dimension_numbers = #tpu.dot_dimension_numbers<[1], [0], [0], [1], [0, 0, 1, 1], [], []>} : vector<256x32xbf16>, vector<32x384xbf16>, vector<256x384xf32> -> vector<256x384xf32>
    %6 = vector.broadcast %1 : vector<1x384xf32> to vector<256x384xf32>
    %7 = arith.addf %5, %6 : vector<256x384xf32>
    %cst_7 = arith.constant 0.000000e+00 : f32
    %8 = vector.broadcast %cst_7 : f32 to vector<256x384xf32>
    %9 = arith.maximumf %7, %8 : vector<256x384xf32>
    %10 = arith.truncf %9 : vector<256x384xf32> to vector<256x384xbf16>
    %c0_8 = arith.constant 0 : index
    %c0_9 = arith.constant 0 : index
    %11 = vector.load %arg3[%c0_8, %c0_9] : memref<384x384xbf16, #tpu.memory_space<vmem>>, vector<384x384xbf16>
    %cst_10 = arith.constant dense<0.000000e+00> : vector<256x384xf32>
    %12 = tpu.matmul %10, %11, %cst_10 {dimension_numbers = #tpu.dot_dimension_numbers<[1], [0], [0], [1], [0, 0, 1, 1], [], []>} : vector<256x384xbf16>, vector<384x384xbf16>, vector<256x384xf32> -> vector<256x384xf32>
    %13 = vector.broadcast %2 : vector<1x384xf32> to vector<256x384xf32>
    %14 = arith.addf %12, %13 : vector<256x384xf32>
    %cst_11 = arith.constant 0.000000e+00 : f32
    %15 = vector.broadcast %cst_11 : f32 to vector<256x384xf32>
    %16 = arith.maximumf %14, %15 : vector<256x384xf32>
    %17 = arith.truncf %16 : vector<256x384xf32> to vector<256x384xbf16>
    %c0_12 = arith.constant 0 : index
    %c0_13 = arith.constant 0 : index
    %18 = vector.load %arg4[%c0_12, %c0_13] : memref<384x128xbf16, #tpu.memory_space<vmem>>, vector<384x128xbf16>
    %cst_14 = arith.constant dense<0.000000e+00> : vector<256x128xf32>
    %19 = tpu.matmul %17, %18, %cst_14 {dimension_numbers = #tpu.dot_dimension_numbers<[1], [0], [0], [1], [0, 0, 1, 1], [], []>} : vector<256x384xbf16>, vector<384x128xbf16>, vector<256x128xf32> -> vector<256x128xf32>
    %20 = vector.broadcast %3 : vector<1x128xf32> to vector<256x128xf32>
    %21 = arith.addf %19, %20 : vector<256x128xf32>
    %cst_15 = arith.constant 0.000000e+00 : f32
    %22 = vector.broadcast %cst_15 : f32 to vector<256x128xf32>
    %23 = arith.maximumf %21, %22 : vector<256x128xf32>
    %24 = arith.truncf %23 : vector<256x128xf32> to vector<256x128xbf16>
    %c0_16 = arith.constant 0 : index
    %c0_17 = arith.constant 0 : index
    %25 = vector.load %arg5[%c0_16, %c0_17] : memref<128x128xbf16, #tpu.memory_space<vmem>>, vector<128x128xbf16>
    %cst_18 = arith.constant dense<0.000000e+00> : vector<256x128xf32>
    %26 = tpu.matmul %24, %25, %cst_18 {dimension_numbers = #tpu.dot_dimension_numbers<[1], [0], [0], [1], [0, 0, 1, 1], [], []>} : vector<256x128xbf16>, vector<128x128xbf16>, vector<256x128xf32> -> vector<256x128xf32>
    %c0_19 = arith.constant 0 : index
    %c0_20 = arith.constant 0 : index
    %27 = vector.load %arg7[%c0_19, %c0_20] : memref<256x128xf32, #tpu.memory_space<vmem>>, vector<256x128xf32>
    tpu.vector_store %arg7[%c0_19, %c0_20], %26 {strides = array<i32>} : memref<256x128xf32, #tpu.memory_space<vmem>>, vector<256x128xf32>,
    return
  }
  func.func @transform_0(%arg0: i32) -> (i32, i32) {
    %c0_i32 = arith.constant 0 : i32
    %c0_i32_0 = arith.constant 0 : i32
    return %arg0, %c0_i32 : i32, i32
  }
  func.func @transform_1(%arg0: i32) -> (i32, i32) {
    %c0_i32 = arith.constant 0 : i32
    %c0_i32_0 = arith.constant 0 : i32
    %c0_i32_1 = arith.constant 0 : i32
    return %c0_i32, %c0_i32_0 : i32, i32
  }
  func.func @transform_2(%arg0: i32) -> (i32, i32) {
    %c0_i32 = arith.constant 0 : i32
    %c0_i32_0 = arith.constant 0 : i32
    %c0_i32_1 = arith.constant 0 : i32
    return %c0_i32, %c0_i32_0 : i32, i32
  }
  func.func @transform_3(%arg0: i32) -> (i32, i32) {
    %c0_i32 = arith.constant 0 : i32
    %c0_i32_0 = arith.constant 0 : i32
    %c0_i32_1 = arith.constant 0 : i32
    return %c0_i32, %c0_i32_0 : i32, i32
  }
  func.func @transform_4(%arg0: i32) -> (i32, i32) {
    %c0_i32 = arith.constant 0 : i32
    %c0_i32_0 = arith.constant 0 : i32
    %c0_i32_1 = arith.constant 0 : i32
    return %c0_i32, %c0_i32_0 : i32, i32
  }
  func.func @transform_5(%arg0: i32) -> (i32, i32) {
    %c0_i32 = arith.constant 0 : i32
    %c0_i32_0 = arith.constant 0 : i32
    %c0_i32_1 = arith.constant 0 : i32
    return %c0_i32, %c0_i32_0 : i32, i32
  }
  func.func @transform_6(%arg0: i32) -> (i32, i32) {
    %c0_i32 = arith.constant 0 : i32
    %c0_i32_0 = arith.constant 0 : i32
    return %arg0, %c0_i32 : i32, i32
  }
}

</mosaic_0001>

<llo_original>
// kernel: tpu_custom_call.1
$region0: #{tpu_custom_call.1}
  #allocation0 [shape = 'u32[]', space=smem, size = 0x4, offset = 0x4, fixed_abs, tag = 'smem constant byte address 0x4 - core index']
  #allocation1 [shape = 'u32[144,128]{1,0:T(1,128)}', space=vmem, size = 0x12000, scoped, tag = 'internal scratch']
  %s0 = inlined_call_operand.vmem [shape: bf16[256,32], index: 0, kind: input, shape index: {}]
  %s1 = inlined_call_operand.vmem [shape: bf16[32,384], index: 1, kind: input, shape index: {}]
  %s2 = inlined_call_operand.hbm [shape: bf16[384,384], index: 2, kind: input, shape index: {}]
  %s3 = inlined_call_operand.hbm [shape: bf16[384,128], index: 3, kind: input, shape index: {}]
  %s4 = inlined_call_operand.vmem [shape: bf16[128,128], index: 4, kind: input, shape index: {}]
  %s5 = inlined_call_operand.vmem [shape: f32[1,896], index: 5, kind: input, shape index: {}]
  %s6 = inlined_call_operand.hbm [shape: f32[256,128], index: 6, kind: output, shape index: {}]
  %s7 = sld [smem:[#allocation0]]
  $region42: #{tpu_custom_call.1} parent=0
    _
  %s9 = ssub.s32 1, %s7
  %s10 = scalar_select 0, %s9, %s7
  $region1: #{tpu_custom_call.1} parent=0
    #allocation2 [shape = 'u8[294912]{0}', space=vmem, size = 0x48000, scoped, tag = 'input window, operand 2, single buffered']
    #allocation3 [shape = 's32[1]{0}', space=sflag, size = 0x4, scoped, tag = 'scoped memory for tpu_custom_call.1']
    #allocation4 [shape = 's32[1]{0}', space=sflag, size = 0x4, scoped, tag = 'scoped memory for tpu_custom_call.1']
    #allocation5 [shape = 'u8[98304]{0}', space=vmem, size = 0x18000, scoped, tag = 'input window, operand 3, single buffered']
    #allocation6 [shape = 's32[1]{0}', space=sflag, size = 0x4, scoped, tag = 'scoped memory for tpu_custom_call.1']
    #allocation7 [shape = 'u8[131072]{0}', space=vmem, size = 0x20000, scoped, tag = 'output window, operand 0, single buffered']
    %11 = vsyncpa [#allocation3], 0
    %12 = vsyncpa [#allocation6], 0
    %13 = vsyncpa [#allocation4], 0
    // Predicated region
    $region2: #{tpu_custom_call.1} parent=1 // pred_check
      _
    $region3: #{tpu_custom_call.1} parent=1 // pred_check_branch
      %15 = sbr.rel (0) target = $region5
    $region4: #{tpu_custom_call.1} parent=1 // pred_region
      _
    $region5: #{tpu_custom_call.1} parent=1 // pred_fallthru
      _
    // Predicated region
    $region6: #{tpu_custom_call.1} parent=1 // pred_check
      _
    $region7: #{tpu_custom_call.1} parent=1 // pred_check_branch
      %17 = sbr.rel (0) target = $region9
    $region8: #{tpu_custom_call.1} parent=1 // pred_region
      _
    $region9: #{tpu_custom_call.1} parent=1 // pred_fallthru
      _
    // Predicated region
    $region10: #{tpu_custom_call.1} parent=1 // pred_check
      _
    $region11: #{tpu_custom_call.1} parent=1 // pred_check_branch
      %19 = sbr.rel (0) target = $region13
    $region12: #{tpu_custom_call.1} parent=1 // pred_region
      %s21 = ssub.s32 9216, 9216
      %22 = vsyncadd [#allocation3], %s21
      %s23 = sshll.u32 [#allocation2], 4
      %s24 = int_to_ptr.vmem [resolvable:$true] %s23
      %29 = dma.hbm_to_vmem [thread:$0]  %s2, 9216, %s24, [#allocation3], 192, 192, 12
    $region13: #{tpu_custom_call.1} parent=1 // pred_fallthru
      _
    // Predicated region
    $region14: #{tpu_custom_call.1} parent=1 // pred_check
      _
    $region15: #{tpu_custom_call.1} parent=1 // pred_check_branch
      %31 = sbr.rel (0) target = $region17
    $region16: #{tpu_custom_call.1} parent=1 // pred_region
      %s33 = ssub.s32 3072, 3072
      %34 = vsyncadd [#allocation6], %s33
      %s35 = sshll.u32 [#allocation5], 4
      %s36 = int_to_ptr.vmem [resolvable:$true] %s35
      %41 = dma.hbm_to_vmem [thread:$0]  %s3, 3072, %s36, [#allocation6], 64, 64, 4
    $region17: #{tpu_custom_call.1} parent=1 // pred_fallthru
      _
    // Predicated region
    $region18: #{tpu_custom_call.1} parent=1 // pred_check
      _
    $region19: #{tpu_custom_call.1} parent=1 // pred_check_branch
      %43 = sbr.rel (0) target = $region21
    $region20: #{tpu_custom_call.1} parent=1 // pred_region
      _
    $region21: #{tpu_custom_call.1} parent=1 // pred_fallthru
      _
    // Predicated region
    $region22: #{tpu_custom_call.1} parent=1 // pred_check
      _
    $region23: #{tpu_custom_call.1} parent=1 // pred_check_branch
      %45 = sbr.rel (0) target = $region25
    $region24: #{tpu_custom_call.1} parent=1 // pred_region
      _
    $region25: #{tpu_custom_call.1} parent=1 // pred_fallthru
      _
    // Predicated region
    $region26: #{tpu_custom_call.1} parent=1 // pred_check
      _
    $region27: #{tpu_custom_call.1} parent=1 // pred_check_branch
      %47 = sbr.rel (0) target = $region29
    $region28: #{tpu_custom_call.1} parent=1 // pred_region
      %48 = dma.done [#allocation3], 9216
    $region29: #{tpu_custom_call.1} parent=1 // pred_fallthru
      _
    // Predicated region
    $region30: #{tpu_custom_call.1} parent=1 // pred_check
      _
    $region31: #{tpu_custom_call.1} parent=1 // pred_check_branch
      %50 = sbr.rel (0) target = $region33
    $region32: #{tpu_custom_call.1} parent=1 // pred_region
      %51 = dma.done [#allocation6], 3072
    $region33: #{tpu_custom_call.1} parent=1 // pred_fallthru
      _
    %v53 = vld [vmem:[%s0] sm:$0xf]
    %v54 = vld [vmem:[%s0 + $0x4] sm:$0xf]
    %v55 = vld [vmem:[%s0 + $0x8] sm:$0xf]
    %v56 = vld [vmem:[%s0 + $0xc] sm:$0xf]
    %v57 = vld [vmem:[%s0 + $0x10] sm:$0xf]
    %v58 = vld [vmem:[%s0 + $0x14] sm:$0xf]
    %v59 = vld [vmem:[%s0 + $0x18] sm:$0xf]
    %v60 = vld [vmem:[%s0 + $0x1c] sm:$0xf]
    %v61 = vld [vmem:[%s0 + $0x20] sm:$0xf]
    %v62 = vld [vmem:[%s0 + $0x24] sm:$0xf]
    %v63 = vld [vmem:[%s0 + $0x28] sm:$0xf]
    %v64 = vld [vmem:[%s0 + $0x2c] sm:$0xf]
    %v65 = vld [vmem:[%s0 + $0x30] sm:$0xf]
    %v66 = vld [vmem:[%s0 + $0x34] sm:$0xf]
    %v67 = vld [vmem:[%s0 + $0x38] sm:$0xf]
    %v68 = vld [vmem:[%s0 + $0x3c] sm:$0xf]
    %v69 = vld [vmem:[%s0 + $0x40] sm:$0xf]
    %v70 = vld [vmem:[%s0 + $0x44] sm:$0xf]
    %v71 = vld [vmem:[%s0 + $0x48] sm:$0xf]
    %v72 = vld [vmem:[%s0 + $0x4c] sm:$0xf]
    %v73 = vld [vmem:[%s0 + $0x50] sm:$0xf]
    %v74 = vld [vmem:[%s0 + $0x54] sm:$0xf]
    %v75 = vld [vmem:[%s0 + $0x58] sm:$0xf]
    %v76 = vld [vmem:[%s0 + $0x5c] sm:$0xf]
    %v77 = vld [vmem:[%s0 + $0x60] sm:$0xf]
    %v78 = vld [vmem:[%s0 + $0x64] sm:$0xf]
    %v79 = vld [vmem:[%s0 + $0x68] sm:$0xf]
    %v80 = vld [vmem:[%s0 + $0x6c] sm:$0xf]
    %v81 = vld [vmem:[%s0 + $0x70] sm:$0xf]
    %v82 = vld [vmem:[%s0 + $0x74] sm:$0xf]
    %v83 = vld [vmem:[%s0 + $0x78] sm:$0xf]
    %v84 = vld [vmem:[%s0 + $0x7c] sm:$0xf]
    %v85 = vld [vmem:[%s5] sm:$0x7]
    %v86 = vld [vmem:[%s5 + $0x3] sm:$0x7]
    %v87 = vld [vmem:[%s5 + $0x6] sm:$0x1]
    %v88 = vld [vmem:[%s1] sm:$0xff]
    %v89 = vld [vmem:[%s1 + $0x8] sm:$0xf]
    %v90 = vld [vmem:[%s1 + $0xc] sm:$0xff]
    %v91 = vld [vmem:[%s1 + $0x14] sm:$0xf]
    %v92 = vld [vmem:[%s1 + $0x18] sm:$0xff]
    %v93 = vld [vmem:[%s1 + $0x20] sm:$0xf]
    %v94 = vld [vmem:[%s1 + $0x24] sm:$0xff]
    %v95 = vld [vmem:[%s1 + $0x2c] sm:$0xf]
    %v97 = vlaneseq
    %v98 = vshrl.u32 %v97, 7
    %v99 = vsub.s32 0, %v98
    %v100 = vrot.slane %v85, %v99
    %v101 = vlaneseq
    %v102 = vshrl.u32 %v101, 7
    %v103 = vsub.s32 1, %v102
    %v104 = vrot.slane %v85, %v103
    %v105 = vlaneseq
    %v106 = vshrl.u32 %v105, 7
    %v107 = vsub.s32 2, %v106
    %v108 = vrot.slane %v85, %v107
    %v144 = vunpack.c.l.b16 %v53
    %v145 = vunpack.c.l.b16 %v54
    %v146 = vunpack.c.l.b16 %v55
    %v147 = vunpack.c.l.b16 %v56
    %v148 = vunpack.c.l.b16 %v57
    %v149 = vunpack.c.l.b16 %v58
    %v150 = vunpack.c.l.b16 %v59
    %v151 = vunpack.c.l.b16 %v60
    %v152 = vunpack.c.l.b16 %v61
    %v153 = vunpack.c.l.b16 %v62
    %v154 = vunpack.c.l.b16 %v63
    %v155 = vunpack.c.l.b16 %v64
    %v156 = vunpack.c.l.b16 %v65
    %v157 = vunpack.c.l.b16 %v66
    %v158 = vunpack.c.l.b16 %v67
    %v159 = vunpack.c.l.b16 %v68
    %v160 = vunpack.c.l.b16 %v69
    %v161 = vunpack.c.l.b16 %v70
    %v162 = vunpack.c.l.b16 %v71
    %v163 = vunpack.c.l.b16 %v72
    %v164 = vunpack.c.l.b16 %v73
    %v165 = vunpack.c.l.b16 %v74
    %v166 = vunpack.c.l.b16 %v75
    %v167 = vunpack.c.l.b16 %v76
    %v168 = vunpack.c.l.b16 %v77
    %v169 = vunpack.c.l.b16 %v78
    %v170 = vunpack.c.l.b16 %v79
    %v171 = vunpack.c.l.b16 %v80
    %v172 = vunpack.c.l.b16 %v81
    %v173 = vunpack.c.l.b16 %v82
    %v174 = vunpack.c.l.b16 %v83
    %v175 = vunpack.c.l.b16 %v84
    %v176 = vpack.c.b16 %v145, %v144
    %v177 = vpack.c.b16 %v147, %v146
    %v178 = vpack.c.b16 %v149, %v148
    %v179 = vpack.c.b16 %v151, %v150
    %v180 = vpack.c.b16 %v153, %v152
    %v181 = vpack.c.b16 %v155, %v154
    %v182 = vpack.c.b16 %v157, %v156
    %v183 = vpack.c.b16 %v159, %v158
    %v184 = vpack.c.b16 %v161, %v160
    %v185 = vpack.c.b16 %v163, %v162
    %v186 = vpack.c.b16 %v165, %v164
    %v187 = vpack.c.b16 %v167, %v166
    %v188 = vpack.c.b16 %v169, %v168
    %v189 = vpack.c.b16 %v171, %v170
    %v190 = vpack.c.b16 %v173, %v172
    %v191 = vpack.c.b16 %v175, %v174
    %v200 = vunpack.c.l.b16 %v88
    %v201 = vunpack.c.h.b16 %v88
    %v202 = vunpack.c.l.b16 %v89
    %v203 = vunpack.c.l.b16 %v90
    %v204 = vunpack.c.h.b16 %v90
    %v205 = vunpack.c.l.b16 %v91
    %v206 = vunpack.c.l.b16 %v92
    %v207 = vunpack.c.h.b16 %v92
    %v208 = vunpack.c.l.b16 %v93
    %v209 = vunpack.c.l.b16 %v94
    %v210 = vunpack.c.h.b16 %v94
    %v211 = vunpack.c.l.b16 %v95
    %v212 = vpack.c.b16 %v203, %v200
    %v213 = vpack.c.b16 %v204, %v201
    %v214 = vpack.c.b16 %v205, %v202
    %v215 = vpack.c.b16 %v209, %v206
    %v216 = vpack.c.b16 %v210, %v207
    %v217 = vpack.c.b16 %v211, %v208
    %vm224 = vcmask 261120
    %v226 = vsel %vm224, %v176, 0
    %v229 = vsel %vm224, %v177, 0
    %v232 = vsel %vm224, %v178, 0
    %v235 = vsel %vm224, %v179, 0
    %v238 = vsel %vm224, %v180, 0
    %v241 = vsel %vm224, %v181, 0
    %v244 = vsel %vm224, %v182, 0
    %v247 = vsel %vm224, %v183, 0
    %v250 = vsel %vm224, %v184, 0
    %v253 = vsel %vm224, %v185, 0
    %v256 = vsel %vm224, %v186, 0
    %v259 = vsel %vm224, %v187, 0
    %v262 = vsel %vm224, %v188, 0
    %v265 = vsel %vm224, %v189, 0
    %v268 = vsel %vm224, %v190, 0
    %v271 = vsel %vm224, %v191, 0
    %273 = vmatprep.subr.bf16.mxu0 0
    %274 = vmatpush1.bf16.msra.mxu0 0
    %275 = vmatprep.subr.bf16.mxu0 0
    %276 = vmatpush1.bf16.msra.mxu0 0
    %277 = vmatprep.subr.bf16.mxu0 0
    %278 = vmatpush1.bf16.msra.mxu0 0
    %279 = vmatprep.subr.bf16.mxu0 0
    %280 = vmatpush1.bf16.msra.mxu0 0
    %281 = vmatprep.subr.bf16.mxu0 0
    %282 = vmatpush1.bf16.msra.mxu0 0
    %283 = vmatprep.subr.bf16.mxu0 0
    %284 = vmatpush1.bf16.msra.mxu0 0
    %285 = vmatprep.subr.bf16.mxu0 %v216
    %286 = vmatpush1.bf16.msra.mxu0 %v215
    %287 = vmatprep.subr.bf16.mxu0 %v213
    %288 = vmatpush1.bf16.msra.mxu0 %v212
    %289 = vmatprep.subr.bf16.mxu0 0
    %290 = vmatpush2.bf16.msra.mxu0 0
    %291 = vmatprep.subr.bf16.mxu0 0
    %292 = vmatpush2.bf16.msra.mxu0 0
    %293 = vmatprep.subr.bf16.mxu0 0
    %294 = vmatpush2.bf16.msra.mxu0 0
    %295 = vmatprep.subr.bf16.mxu0 0
    %296 = vmatpush2.bf16.msra.mxu0 0
    %297 = vmatprep.subr.bf16.mxu0 0
    %298 = vmatpush2.bf16.msra.mxu0 0
    %299 = vmatprep.subr.bf16.mxu0 0
    %300 = vmatpush2.bf16.msra.mxu0 0
    %301 = vmatprep.subr.bf16.mxu0 0
    %302 = vmatpush2.bf16.msra.mxu0 0
    %303 = vmatprep.subr.bf16.mxu0 0
    %304 = vmatpush2.bf16.msra.mxu0 0
    %305 = vmatprep.mubr.bf16.mxu0 0
    %306 = vmatmul.mubr.bf16.gmra.mxu0 %v226
    %v307 = vpop.f32.mrf.mxu0
    %v308 = vadd.f32 %v100, %v307
    %v309 = vpop.f32.mrf.mxu0
    %v310 = vadd.f32 %v104, %v309
    %v311 = vpop.f32.mrf.mxu0
    %v312 = vadd.f32 %v100, %v311
    %v313 = vpop.f32.mrf.mxu0
    %v314 = vadd.f32 %v104, %v313
    %315 = vmatprep.mubr.bf16.mxu0 0
    %316 = vmatmul.mubr.bf16.gmra.mxu0 %v229
    %v317 = vpop.f32.mrf.mxu0
    %v318 = vadd.f32 %v100, %v317
    %v319 = vpop.f32.mrf.mxu0
    %v320 = vadd.f32 %v104, %v319
    %v321 = vpop.f32.mrf.mxu0
    %v322 = vadd.f32 %v100, %v321
    %v323 = vpop.f32.mrf.mxu0
    %v324 = vadd.f32 %v104, %v323
    %325 = vmatprep.mubr.bf16.mxu0 0
    %326 = vmatmul.mubr.bf16.gmra.mxu0 %v232
    %v327 = vpop.f32.mrf.mxu0
    %v328 = vadd.f32 %v100, %v327
    %v329 = vpop.f32.mrf.mxu0
    %v330 = vadd.f32 %v104, %v329
    %v331 = vpop.f32.mrf.mxu0
    %v332 = vadd.f32 %v100, %v331
    %v333 = vpop.f32.mrf.mxu0
    %v334 = vadd.f32 %v104, %v333
    %335 = vmatprep.mubr.bf16.mxu0 0
    %336 = vmatmul.mubr.bf16.gmra.mxu0 %v235
    %v337 = vpop.f32.mrf.mxu0
    %v338 = vadd.f32 %v100, %v337
    %v339 = vpop.f32.mrf.mxu0
    %v340 = vadd.f32 %v104, %v339
    %v341 = vpop.f32.mrf.mxu0
    %v342 = vadd.f32 %v100, %v341
    %v343 = vpop.f32.mrf.mxu0
    %v344 = vadd.f32 %v104, %v343
    %345 = vmatprep.mubr.bf16.mxu0 0
    %346 = vmatmul.mubr.bf16.gmra.mxu0 %v238
    %v347 = vpop.f32.mrf.mxu0
    %v348 = vadd.f32 %v100, %v347
    %v349 = vpop.f32.mrf.mxu0
    %v350 = vadd.f32 %v104, %v349
    %v351 = vpop.f32.mrf.mxu0
    %v352 = vadd.f32 %v100, %v351
    %v353 = vpop.f32.mrf.mxu0
    %v354 = vadd.f32 %v104, %v353
    %355 = vmatprep.mubr.bf16.mxu0 0
    %356 = vmatmul.mubr.bf16.gmra.mxu0 %v241
    %v357 = vpop.f32.mrf.mxu0
    %v358 = vadd.f32 %v100, %v357
    %v359 = vpop.f32.mrf.mxu0
    %v360 = vadd.f32 %v104, %v359
    %v361 = vpop.f32.mrf.mxu0
    %v362 = vadd.f32 %v100, %v361
    %v363 = vpop.f32.mrf.mxu0
    %v364 = vadd.f32 %v104, %v363
    %365 = vmatprep.mubr.bf16.mxu0 0
    %366 = vmatmul.mubr.bf16.gmra.mxu0 %v244
    %v367 = vpop.f32.mrf.mxu0
    %v368 = vadd.f32 %v100, %v367
    %v369 = vpop.f32.mrf.mxu0
    %v370 = vadd.f32 %v104, %v369
    %v371 = vpop.f32.mrf.mxu0
    %v372 = vadd.f32 %v100, %v371
    %v373 = vpop.f32.mrf.mxu0
    %v374 = vadd.f32 %v104, %v373
    %375 = vmatprep.mubr.bf16.mxu0 0
    %376 = vmatmul.mubr.bf16.gmra.mxu0 %v247
    %v377 = vpop.f32.mrf.mxu0
    %v378 = vadd.f32 %v100, %v377
    %v379 = vpop.f32.mrf.mxu0
    %v380 = vadd.f32 %v104, %v379
    %v381 = vpop.f32.mrf.mxu0
    %v382 = vadd.f32 %v100, %v381
    %v383 = vpop.f32.mrf.mxu0
    %v384 = vadd.f32 %v104, %v383
    %385 = vmatprep.mubr.bf16.mxu0 0
    %386 = vmatmul.mubr.bf16.gmra.mxu0 %v250
    %v387 = vpop.f32.mrf.mxu0
    %v388 = vadd.f32 %v100, %v387
    %v389 = vpop.f32.mrf.mxu0
    %v390 = vadd.f32 %v104, %v389
    %v391 = vpop.f32.mrf.mxu0
    %v392 = vadd.f32 %v100, %v391
    %v393 = vpop.f32.mrf.mxu0
    %v394 = vadd.f32 %v104, %v393
    %395 = vmatprep.mubr.bf16.mxu0 0
    %396 = vmatmul.mubr.bf16.gmra.mxu0 %v253
    %v397 = vpop.f32.mrf.mxu0
    %v398 = vadd.f32 %v100, %v397
    %v399 = vpop.f32.mrf.mxu0
    %v400 = vadd.f32 %v104, %v399
    %v401 = vpop.f32.mrf.mxu0
    %v402 = vadd.f32 %v100, %v401
    %v403 = vpop.f32.mrf.mxu0
    %v404 = vadd.f32 %v104, %v403
    %405 = vmatprep.mubr.bf16.mxu0 0
    %406 = vmatmul.mubr.bf16.gmra.mxu0 %v256
    %v407 = vpop.f32.mrf.mxu0
    %v408 = vadd.f32 %v100, %v407
    %v409 = vpop.f32.mrf.mxu0
    %v410 = vadd.f32 %v104, %v409
    %v411 = vpop.f32.mrf.mxu0
    %v412 = vadd.f32 %v100, %v411
    %v413 = vpop.f32.mrf.mxu0
    %v414 = vadd.f32 %v104, %v413
    %415 = vmatprep.mubr.bf16.mxu0 0
    %416 = vmatmul.mubr.bf16.gmra.mxu0 %v259
    %v417 = vpop.f32.mrf.mxu0
    %v418 = vadd.f32 %v100, %v417
    %v419 = vpop.f32.mrf.mxu0
    %v420 = vadd.f32 %v104, %v419
    %v421 = vpop.f32.mrf.mxu0
    %v422 = vadd.f32 %v100, %v421
    %v423 = vpop.f32.mrf.mxu0
    %v424 = vadd.f32 %v104, %v423
    %425 = vmatprep.mubr.bf16.mxu0 0
    %426 = vmatmul.mubr.bf16.gmra.mxu0 %v262
    %v427 = vpop.f32.mrf.mxu0
    %v428 = vadd.f32 %v100, %v427
    %v429 = vpop.f32.mrf.mxu0
    %v430 = vadd.f32 %v104, %v429
    %v431 = vpop.f32.mrf.mxu0
    %v432 = vadd.f32 %v100, %v431
    %v433 = vpop.f32.mrf.mxu0
    %v434 = vadd.f32 %v104, %v433
    %435 = vmatprep.mubr.bf16.mxu0 0
    %436 = vmatmul.mubr.bf16.gmra.mxu0 %v265
    %v437 = vpop.f32.mrf.mxu0
    %v438 = vadd.f32 %v100, %v437
    %v439 = vpop.f32.mrf.mxu0
    %v440 = vadd.f32 %v104, %v439
    %v441 = vpop.f32.mrf.mxu0
    %v442 = vadd.f32 %v100, %v441
    %v443 = vpop.f32.mrf.mxu0
    %v444 = vadd.f32 %v104, %v443
    %445 = vmatprep.mubr.bf16.mxu0 0
    %446 = vmatmul.mubr.bf16.gmra.mxu0 %v268
    %v447 = vpop.f32.mrf.mxu0
    %v448 = vadd.f32 %v100, %v447
    %v449 = vpop.f32.mrf.mxu0
    %v450 = vadd.f32 %v104, %v449
    %v451 = vpop.f32.mrf.mxu0
    %v452 = vadd.f32 %v100, %v451
    %v453 = vpop.f32.mrf.mxu0
    %v454 = vadd.f32 %v104, %v453
    %455 = vmatprep.mubr.bf16.mxu0 0
    %456 = vmatmul.mubr.bf16.gmra.mxu0 %v271
    %v457 = vpop.f32.mrf.mxu0
    %v458 = vadd.f32 %v100, %v457
    %v459 = vpop.f32.mrf.mxu0
    %v460 = vadd.f32 %v104, %v459
    %v461 = vpop.f32.mrf.mxu0
    %v462 = vadd.f32 %v100, %v461
    %v463 = vpop.f32.mrf.mxu0
    %v464 = vadd.f32 %v104, %v463
    %465 = vdwg.mxu0
    %466 = vmatprep.subr.bf16.mxu0 0
    %467 = vmatpush1.bf16.msra.mxu0 0
    %468 = vmatprep.subr.bf16.mxu0 0
    %469 = vmatpush1.bf16.msra.mxu0 0
    %470 = vmatprep.subr.bf16.mxu0 0
    %471 = vmatpush1.bf16.msra.mxu0 0
    %472 = vmatprep.subr.bf16.mxu0 0
    %473 = vmatpush1.bf16.msra.mxu0 0
    %474 = vmatprep.subr.bf16.mxu0 0
    %475 = vmatpush1.bf16.msra.mxu0 0
    %476 = vmatprep.subr.bf16.mxu0 0
    %477 = vmatpush1.bf16.msra.mxu0 0
    %478 = vmatprep.subr.bf16.mxu0 0
    %479 = vmatpush1.bf16.msra.mxu0 %v217
    %480 = vmatprep.subr.bf16.mxu0 0
    %481 = vmatpush1.bf16.msra.mxu0 %v214
    %482 = vmatprep.subr.bf16.mxu0 0
    %483 = vmatpush2.bf16.msra.mxu0 0
    %484 = vmatprep.subr.bf16.mxu0 0
    %485 = vmatpush2.bf16.msra.mxu0 0
    %486 = vmatprep.subr.bf16.mxu0 0
    %487 = vmatpush2.bf16.msra.mxu0 0
    %488 = vmatprep.subr.bf16.mxu0 0
    %489 = vmatpush2.bf16.msra.mxu0 0
    %490 = vmatprep.subr.bf16.mxu0 0
    %491 = vmatpush2.bf16.msra.mxu0 0
    %492 = vmatprep.subr.bf16.mxu0 0
    %493 = vmatpush2.bf16.msra.mxu0 0
    %494 = vmatprep.subr.bf16.mxu0 0
    %495 = vmatpush2.bf16.msra.mxu0 0
    %496 = vmatprep.subr.bf16.mxu0 0
    %497 = vmatpush2.bf16.msra.mxu0 0
    %498 = vmatprep.mubr.bf16.mxu0 0
    %499 = vmatmul.mubr.bf16.gmra.mxu0 %v226
    %v500 = vpop.f32.mrf.mxu0
    %v501 = vadd.f32 %v108, %v500
    %v502 = vpop.f32.mrf.mxu0
    %v503 = vpop.f32.mrf.mxu0
    %v504 = vadd.f32 %v108, %v503
    %v505 = vpop.f32.mrf.mxu0
    %506 = vmatprep.mubr.bf16.mxu0 0
    %507 = vmatmul.mubr.bf16.gmra.mxu0 %v229
    %v508 = vpop.f32.mrf.mxu0
    %v509 = vadd.f32 %v108, %v508
    %v510 = vpop.f32.mrf.mxu0
    %v511 = vpop.f32.mrf.mxu0
    %v512 = vadd.f32 %v108, %v511
    %v513 = vpop.f32.mrf.mxu0
    %514 = vmatprep.mubr.bf16.mxu0 0
    %515 = vmatmul.mubr.bf16.gmra.mxu0 %v232
    %v516 = vpop.f32.mrf.mxu0
    %v517 = vadd.f32 %v108, %v516
    %v518 = vpop.f32.mrf.mxu0
    %v519 = vpop.f32.mrf.mxu0
    %v520 = vadd.f32 %v108, %v519
    %v521 = vpop.f32.mrf.mxu0
    %522 = vmatprep.mubr.bf16.mxu0 0
    %523 = vmatmul.mubr.bf16.gmra.mxu0 %v235
    %v524 = vpop.f32.mrf.mxu0
    %v525 = vadd.f32 %v108, %v524
    %v526 = vpop.f32.mrf.mxu0
    %v527 = vpop.f32.mrf.mxu0
    %v528 = vadd.f32 %v108, %v527
    %v529 = vpop.f32.mrf.mxu0
    %530 = vmatprep.mubr.bf16.mxu0 0
    %531 = vmatmul.mubr.bf16.gmra.mxu0 %v238
    %v532 = vpop.f32.mrf.mxu0
    %v533 = vadd.f32 %v108, %v532
    %v534 = vpop.f32.mrf.mxu0
    %v535 = vpop.f32.mrf.mxu0
    %v536 = vadd.f32 %v108, %v535
    %v537 = vpop.f32.mrf.mxu0
    %538 = vmatprep.mubr.bf16.mxu0 0
    %539 = vmatmul.mubr.bf16.gmra.mxu0 %v241
    %v540 = vpop.f32.mrf.mxu0
    %v541 = vadd.f32 %v108, %v540
    %v542 = vpop.f32.mrf.mxu0
    %v543 = vpop.f32.mrf.mxu0
    %v544 = vadd.f32 %v108, %v543
    %v545 = vpop.f32.mrf.mxu0
    %546 = vmatprep.mubr.bf16.mxu0 0
    %547 = vmatmul.mubr.bf16.gmra.mxu0 %v244
    %v548 = vpop.f32.mrf.mxu0
    %v549 = vadd.f32 %v108, %v548
    %v550 = vpop.f32.mrf.mxu0
    %v551 = vpop.f32.mrf.mxu0
    %v552 = vadd.f32 %v108, %v551
    %v553 = vpop.f32.mrf.mxu0
    %554 = vmatprep.mubr.bf16.mxu0 0
    %555 = vmatmul.mubr.bf16.gmra.mxu0 %v247
    %v556 = vpop.f32.mrf.mxu0
    %v557 = vadd.f32 %v108, %v556
    %v558 = vpop.f32.mrf.mxu0
    %v559 = vpop.f32.mrf.mxu0
    %v560 = vadd.f32 %v108, %v559
    %v561 = vpop.f32.mrf.mxu0
    %562 = vmatprep.mubr.bf16.mxu0 0
    %563 = vmatmul.mubr.bf16.gmra.mxu0 %v250
    %v564 = vpop.f32.mrf.mxu0
    %v565 = vadd.f32 %v108, %v564
    %v566 = vpop.f32.mrf.mxu0
    %v567 = vpop.f32.mrf.mxu0
    %v568 = vadd.f32 %v108, %v567
    %v569 = vpop.f32.mrf.mxu0
    %570 = vmatprep.mubr.bf16.mxu0 0
    %571 = vmatmul.mubr.bf16.gmra.mxu0 %v253
    %v572 = vpop.f32.mrf.mxu0
    %v573 = vadd.f32 %v108, %v572
    %v574 = vpop.f32.mrf.mxu0
    %v575 = vpop.f32.mrf.mxu0
    %v576 = vadd.f32 %v108, %v575
    %v577 = vpop.f32.mrf.mxu0
    %578 = vmatprep.mubr.bf16.mxu0 0
    %579 = vmatmul.mubr.bf16.gmra.mxu0 %v256
    %v580 = vpop.f32.mrf.mxu0
    %v581 = vadd.f32 %v108, %v580
    %v582 = vpop.f32.mrf.mxu0
    %v583 = vpop.f32.mrf.mxu0
    %v584 = vadd.f32 %v108, %v583
    %v585 = vpop.f32.mrf.mxu0
    %586 = vmatprep.mubr.bf16.mxu0 0
    %587 = vmatmul.mubr.bf16.gmra.mxu0 %v259
    %v588 = vpop.f32.mrf.mxu0
    %v589 = vadd.f32 %v108, %v588
    %v590 = vpop.f32.mrf.mxu0
    %v591 = vpop.f32.mrf.mxu0
    %v592 = vadd.f32 %v108, %v591
    %v593 = vpop.f32.mrf.mxu0
    %594 = vmatprep.mubr.bf16.mxu0 0
    %595 = vmatmul.mubr.bf16.gmra.mxu0 %v262
    %v596 = vpop.f32.mrf.mxu0
    %v597 = vadd.f32 %v108, %v596
    %v598 = vpop.f32.mrf.mxu0
    %v599 = vpop.f32.mrf.mxu0
    %v600 = vadd.f32 %v108, %v599
    %v601 = vpop.f32.mrf.mxu0
    %602 = vmatprep.mubr.bf16.mxu0 0
    %603 = vmatmul.mubr.bf16.gmra.mxu0 %v265
    %v604 = vpop.f32.mrf.mxu0
    %v605 = vadd.f32 %v108, %v604
    %v606 = vpop.f32.mrf.mxu0
    %v607 = vpop.f32.mrf.mxu0
    %v608 = vadd.f32 %v108, %v607
    %v609 = vpop.f32.mrf.mxu0
    %610 = vmatprep.mubr.bf16.mxu0 0
    %611 = vmatmul.mubr.bf16.gmra.mxu0 %v268
    %v612 = vpop.f32.mrf.mxu0
    %v613 = vadd.f32 %v108, %v612
    %v614 = vpop.f32.mrf.mxu0
    %v615 = vpop.f32.mrf.mxu0
    %v616 = vadd.f32 %v108, %v615
    %v617 = vpop.f32.mrf.mxu0
    %618 = vmatprep.mubr.bf16.mxu0 0
    %619 = vmatmul.mubr.bf16.gmra.mxu0 %v271
    %v620 = vpop.f32.mrf.mxu0
    %v621 = vadd.f32 %v108, %v620
    %v622 = vpop.f32.mrf.mxu0
    %v623 = vpop.f32.mrf.mxu0
    %v624 = vadd.f32 %v108, %v623
    %v625 = vpop.f32.mrf.mxu0
    %626 = vdwg.mxu0
    %v627 = vmax.f32 %v308, 0.0
    %v628 = vmax.f32 %v310, 0.0
    %v629 = vmax.f32 %v501, 0.0
    %v630 = vmax.f32 %v312, 0.0
    %v631 = vmax.f32 %v314, 0.0
    %v632 = vmax.f32 %v504, 0.0
    %v633 = vmax.f32 %v318, 0.0
    %v634 = vmax.f32 %v320, 0.0
    %v635 = vmax.f32 %v509, 0.0
    %v636 = vmax.f32 %v322, 0.0
    %v637 = vmax.f32 %v324, 0.0
    %v638 = vmax.f32 %v512, 0.0
    %v639 = vmax.f32 %v328, 0.0
    %v640 = vmax.f32 %v330, 0.0
    %v641 = vmax.f32 %v517, 0.0
    %v642 = vmax.f32 %v332, 0.0
    %v643 = vmax.f32 %v334, 0.0
    %v644 = vmax.f32 %v520, 0.0
    %v645 = vmax.f32 %v338, 0.0
    %v646 = vmax.f32 %v340, 0.0
    %v647 = vmax.f32 %v525, 0.0
    %v648 = vmax.f32 %v342, 0.0
    %v649 = vmax.f32 %v344, 0.0
    %v650 = vmax.f32 %v528, 0.0
    %v651 = vmax.f32 %v348, 0.0
    %v652 = vmax.f32 %v350, 0.0
    %v653 = vmax.f32 %v533, 0.0
    %v654 = vmax.f32 %v352, 0.0
    %v655 = vmax.f32 %v354, 0.0
    %v656 = vmax.f32 %v536, 0.0
    %v657 = vmax.f32 %v358, 0.0
    %v658 = vmax.f32 %v360, 0.0
    %v659 = vmax.f32 %v541, 0.0
    %v660 = vmax.f32 %v362, 0.0
    %v661 = vmax.f32 %v364, 0.0
    %v662 = vmax.f32 %v544, 0.0
    %v663 = vmax.f32 %v368, 0.0
    %v664 = vmax.f32 %v370, 0.0
    %v665 = vmax.f32 %v549, 0.0
    %v666 = vmax.f32 %v372, 0.0
    %v667 = vmax.f32 %v374, 0.0
    %v668 = vmax.f32 %v552, 0.0
    %v669 = vmax.f32 %v378, 0.0
    %v670 = vmax.f32 %v380, 0.0
    %v671 = vmax.f32 %v557, 0.0
    %v672 = vmax.f32 %v382, 0.0
    %v673 = vmax.f32 %v384, 0.0
    %v674 = vmax.f32 %v560, 0.0
    %v675 = vmax.f32 %v388, 0.0
    %v676 = vmax.f32 %v390, 0.0
    %v677 = vmax.f32 %v565, 0.0
    %v678 = vmax.f32 %v392, 0.0
    %v679 = vmax.f32 %v394, 0.0
    %v680 = vmax.f32 %v568, 0.0
    %v681 = vmax.f32 %v398, 0.0
    %v682 = vmax.f32 %v400, 0.0
    %v683 = vmax.f32 %v573, 0.0
    %v684 = vmax.f32 %v402, 0.0
    %v685 = vmax.f32 %v404, 0.0
    %v686 = vmax.f32 %v576, 0.0
    %v687 = vmax.f32 %v408, 0.0
    %v688 = vmax.f32 %v410, 0.0
    %v689 = vmax.f32 %v581, 0.0
    %v690 = vmax.f32 %v412, 0.0
    %v691 = vmax.f32 %v414, 0.0
    %v692 = vmax.f32 %v584, 0.0
    %v693 = vmax.f32 %v418, 0.0
    %v694 = vmax.f32 %v420, 0.0
    %v695 = vmax.f32 %v589, 0.0
    %v696 = vmax.f32 %v422, 0.0
    %v697 = vmax.f32 %v424, 0.0
    %v698 = vmax.f32 %v592, 0.0
    %v699 = vmax.f32 %v428, 0.0
    %v700 = vmax.f32 %v430, 0.0
    %v701 = vmax.f32 %v597, 0.0
    %v702 = vmax.f32 %v432, 0.0
    %v703 = vmax.f32 %v434, 0.0
    %v704 = vmax.f32 %v600, 0.0
    %v705 = vmax.f32 %v438, 0.0
    %v706 = vmax.f32 %v440, 0.0
    %v707 = vmax.f32 %v605, 0.0
    %v708 = vmax.f32 %v442, 0.0
    %v709 = vmax.f32 %v444, 0.0
    %v710 = vmax.f32 %v608, 0.0
    %v711 = vmax.f32 %v448, 0.0
    %v712 = vmax.f32 %v450, 0.0
    %v713 = vmax.f32 %v613, 0.0
    %v714 = vmax.f32 %v452, 0.0
    %v715 = vmax.f32 %v454, 0.0
    %v716 = vmax.f32 %v616, 0.0
    %v717 = vmax.f32 %v458, 0.0
    %v718 = vmax.f32 %v460, 0.0
    %v719 = vmax.f32 %v621, 0.0
    %v720 = vmax.f32 %v462, 0.0
    %v721 = vmax.f32 %v464, 0.0
    %v722 = vmax.f32 %v624, 0.0
    %v723 = vpack.c.bf16 %v630, %v627
    %v724 = vpack.c.bf16 %v631, %v628
    %v725 = vpack.c.bf16 %v632, %v629
    %v726 = vpack.c.bf16 %v636, %v633
    %v727 = vpack.c.bf16 %v637, %v634
    %v728 = vpack.c.bf16 %v638, %v635
    %v729 = vpack.c.bf16 %v642, %v639
    %v730 = vpack.c.bf16 %v643, %v640
    %v731 = vpack.c.bf16 %v644, %v641
    %v732 = vpack.c.bf16 %v648, %v645
    %v733 = vpack.c.bf16 %v649, %v646
    %v734 = vpack.c.bf16 %v650, %v647
    %v735 = vpack.c.bf16 %v654, %v651
    %v736 = vpack.c.bf16 %v655, %v652
    %v737 = vpack.c.bf16 %v656, %v653
    %v738 = vpack.c.bf16 %v660, %v657
    %v739 = vpack.c.bf16 %v661, %v658
    %v740 = vpack.c.bf16 %v662, %v659
    %v741 = vpack.c.bf16 %v666, %v663
    %v742 = vpack.c.bf16 %v667, %v664
    %v743 = vpack.c.bf16 %v668, %v665
    %v744 = vpack.c.bf16 %v672, %v669
    %v745 = vpack.c.bf16 %v673, %v670
    %v746 = vpack.c.bf16 %v674, %v671
    %v747 = vpack.c.bf16 %v678, %v675
    %v748 = vpack.c.bf16 %v679, %v676
    %v749 = vpack.c.bf16 %v680, %v677
    %v750 = vpack.c.bf16 %v684, %v681
    %v751 = vpack.c.bf16 %v685, %v682
    %v752 = vpack.c.bf16 %v686, %v683
    %v753 = vpack.c.bf16 %v690, %v687
    %v754 = vpack.c.bf16 %v691, %v688
    %v755 = vpack.c.bf16 %v692, %v689
    %v756 = vpack.c.bf16 %v696, %v693
    %v757 = vpack.c.bf16 %v697, %v694
    %v758 = vpack.c.bf16 %v698, %v695
    %v759 = vpack.c.bf16 %v702, %v699
    %v760 = vpack.c.bf16 %v703, %v700
    %v761 = vpack.c.bf16 %v704, %v701
    %v762 = vpack.c.bf16 %v708, %v705
    %v763 = vpack.c.bf16 %v709, %v706
    %v764 = vpack.c.bf16 %v710, %v707
    %v765 = vpack.c.bf16 %v714, %v711
    %v766 = vpack.c.bf16 %v715, %v712
    %v767 = vpack.c.bf16 %v716, %v713
    %v768 = vpack.c.bf16 %v720, %v717
    %v769 = vpack.c.bf16 %v721, %v718
    %v770 = vpack.c.bf16 %v722, %v719
    %v771 = vld [vmem:[#allocation2] sm:$0xff]
    %v772 = vld [vmem:[#allocation2 + $0x8] sm:$0xf]
    %v773 = vld [vmem:[#allocation2 + $0xc] sm:$0xff]
    %v774 = vld [vmem:[#allocation2 + $0x14] sm:$0xf]
    %v775 = vld [vmem:[#allocation2 + $0x18] sm:$0xff]
    %v776 = vld [vmem:[#allocation2 + $0x20] sm:$0xf]
    %v777 = vld [vmem:[#allocation2 + $0x24] sm:$0xff]
    %v778 = vld [vmem:[#allocation2 + $0x2c] sm:$0xf]
    %v779 = vld [vmem:[#allocation2 + $0x30] sm:$0xff]
    %v780 = vld [vmem:[#allocation2 + $0x38] sm:$0xf]
    %v781 = vld [vmem:[#allocation2 + $0x3c] sm:$0xff]
    %v782 = vld [vmem:[#allocation2 + $0x44] sm:$0xf]
    %v783 = vld [vmem:[#allocation2 + $0x48] sm:$0xff]
    %v784 = vld [vmem:[#allocation2 + $0x50] sm:$0xf]
    %v785 = vld [vmem:[#allocation2 + $0x54] sm:$0xff]
    %v786 = vld [vmem:[#allocation2 + $0x5c] sm:$0xf]
    %v787 = vld [vmem:[#allocation2 + $0x60] sm:$0xff]
    %v788 = vld [vmem:[#allocation2 + $0x68] sm:$0xf]
    %v789 = vld [vmem:[#allocation2 + $0x6c] sm:$0xff]
    %v790 = vld [vmem:[#allocation2 + $0x74] sm:$0xf]
    %v791 = vld [vmem:[#allocation2 + $0x78] sm:$0xff]
    %v792 = vld [vmem:[#allocation2 + $0x80] sm:$0xf]
    %v793 = vld [vmem:[#allocation2 + $0x84] sm:$0xff]
    %v794 = vld [vmem:[#allocation2 + $0x8c] sm:$0xf]
    %v795 = vld [vmem:[#allocation2 + $0x90] sm:$0xff]
    %v796 = vld [vmem:[#allocation2 + $0x98] sm:$0xf]
    %v797 = vld [vmem:[#allocation2 + $0x9c] sm:$0xff]
    %v798 = vld [vmem:[#allocation2 + $0xa4] sm:$0xf]
    %v799 = vld [vmem:[#allocation2 + $0xa8] sm:$0xff]
    %v800 = vld [vmem:[#allocation2 + $0xb0] sm:$0xf]
    %v801 = vld [vmem:[#allocation2 + $0xb4] sm:$0xff]
    %v802 = vld [vmem:[#allocation2 + $0xbc] sm:$0xf]
    %v803 = vld [vmem:[#allocation2 + $0xc0] sm:$0xff]
    %v804 = vld [vmem:[#allocation2 + $0xc8] sm:$0xf]
    %v805 = vld [vmem:[#allocation2 + $0xcc] sm:$0xff]
    %v806 = vld [vmem:[#allocation2 + $0xd4] sm:$0xf]
    %v807 = vld [vmem:[#allocation2 + $0xd8] sm:$0xff]
    %v808 = vld [vmem:[#allocation2 + $0xe0] sm:$0xf]
    %v809 = vld [vmem:[#allocation2 + $0xe4] sm:$0xff]
    %v810 = vld [vmem:[#allocation2 + $0xec] sm:$0xf]
    %v811 = vld [vmem:[#allocation2 + $0xf0] sm:$0xff]
    %v812 = vld [vmem:[#allocation2 + $0xf8] sm:$0xf]
    %v813 = vld [vmem:[#allocation2 + $0xfc] sm:$0xff]
    %v814 = vld [vmem:[#allocation2 + $0x104] sm:$0xf]
    %v815 = vld [vmem:[#allocation2 + $0x108] sm:$0xff]
    %v816 = vld [vmem:[#allocation2 + $0x110] sm:$0xf]
    %v817 = vld [vmem:[#allocation2 + $0x114] sm:$0xff]
    %v818 = vld [vmem:[#allocation2 + $0x11c] sm:$0xf]
    %v819 = vld [vmem:[#allocation2 + $0x120] sm:$0xff]
    %v820 = vld [vmem:[#allocation2 + $0x128] sm:$0xf]
    %v821 = vld [vmem:[#allocation2 + $0x12c] sm:$0xff]
    %v822 = vld [vmem:[#allocation2 + $0x134] sm:$0xf]
    %v823 = vld [vmem:[#allocation2 + $0x138] sm:$0xff]
    %v824 = vld [vmem:[#allocation2 + $0x140] sm:$0xf]
    %v825 = vld [vmem:[#allocation2 + $0x144] sm:$0xff]
    %v826 = vld [vmem:[#allocation2 + $0x14c] sm:$0xf]
    %v827 = vld [vmem:[#allocation2 + $0x150] sm:$0xff]
    %v828 = vld [vmem:[#allocation2 + $0x158] sm:$0xf]
    %v829 = vld [vmem:[#allocation2 + $0x15c] sm:$0xff]
    %v830 = vld [vmem:[#allocation2 + $0x164] sm:$0xf]
    %v831 = vld [vmem:[#allocation2 + $0x168] sm:$0xff]
    %v832 = vld [vmem:[#allocation2 + $0x170] sm:$0xf]
    %v833 = vld [vmem:[#allocation2 + $0x174] sm:$0xff]
    %v834 = vld [vmem:[#allocation2 + $0x17c] sm:$0xf]
    %v835 = vld [vmem:[#allocation2 + $0x180] sm:$0xff]
    %v836 = vld [vmem:[#allocation2 + $0x188] sm:$0xf]
    %v837 = vld [vmem:[#allocation2 + $0x18c] sm:$0xff]
    %v838 = vld [vmem:[#allocation2 + $0x194] sm:$0xf]
    %v839 = vld [vmem:[#allocation2 + $0x198] sm:$0xff]
    %v840 = vld [vmem:[#allocation2 + $0x1a0] sm:$0xf]
    %v841 = vld [vmem:[#allocation2 + $0x1a4] sm:$0xff]
    %v842 = vld [vmem:[#allocation2 + $0x1ac] sm:$0xf]
    %v843 = vld [vmem:[#allocation2 + $0x1b0] sm:$0xff]
    %v844 = vld [vmem:[#allocation2 + $0x1b8] sm:$0xf]
    %v845 = vld [vmem:[#allocation2 + $0x1bc] sm:$0xff]
    %v846 = vld [vmem:[#allocation2 + $0x1c4] sm:$0xf]
    %v847 = vld [vmem:[#allocation2 + $0x1c8] sm:$0xff]
    %v848 = vld [vmem:[#allocation2 + $0x1d0] sm:$0xf]
    %v849 = vld [vmem:[#allocation2 + $0x1d4] sm:$0xff]
    %v850 = vld [vmem:[#allocation2 + $0x1dc] sm:$0xf]
    %v851 = vld [vmem:[#allocation2 + $0x1e0] sm:$0xff]
    %v852 = vld [vmem:[#allocation2 + $0x1e8] sm:$0xf]
    %v853 = vld [vmem:[#allocation2 + $0x1ec] sm:$0xff]
    %v854 = vld [vmem:[#allocation2 + $0x1f4] sm:$0xf]
    %v855 = vld [vmem:[#allocation2 + $0x1f8] sm:$0xff]
    %v856 = vld [vmem:[#allocation2 + $0x200] sm:$0xf]
    %v857 = vld [vmem:[#allocation2 + $0x204] sm:$0xff]
    %v858 = vld [vmem:[#allocation2 + $0x20c] sm:$0xf]
    %v859 = vld [vmem:[#allocation2 + $0x210] sm:$0xff]
    %v860 = vld [vmem:[#allocation2 + $0x218] sm:$0xf]
    %v861 = vld [vmem:[#allocation2 + $0x21c] sm:$0xff]
    %v862 = vld [vmem:[#allocation2 + $0x224] sm:$0xf]
    %v863 = vld [vmem:[#allocation2 + $0x228] sm:$0xff]
    %v864 = vld [vmem:[#allocation2 + $0x230] sm:$0xf]
    %v865 = vld [vmem:[#allocation2 + $0x234] sm:$0xff]
    %v866 = vld [vmem:[#allocation2 + $0x23c] sm:$0xf]
    %v868 = vlaneseq
    %v869 = vshrl.u32 %v868, 7
    %v870 = vsub.s32 0, %v869
    %v871 = vrot.slane %v86, %v870
    %v872 = vlaneseq
    %v873 = vshrl.u32 %v872, 7
    %v874 = vsub.s32 1, %v873
    %v875 = vrot.slane %v86, %v874
    %v876 = vlaneseq
    %v877 = vshrl.u32 %v876, 7
    %v878 = vsub.s32 2, %v877
    %v879 = vrot.slane %v86, %v878
    %v979 = vunpack.c.l.b16 %v771
    %v980 = vunpack.c.h.b16 %v771
    %v981 = vunpack.c.l.b16 %v772
    %v982 = vunpack.c.l.b16 %v773
    %v983 = vunpack.c.h.b16 %v773
    %v984 = vunpack.c.l.b16 %v774
    %v985 = vunpack.c.l.b16 %v775
    %v986 = vunpack.c.h.b16 %v775
    %v987 = vunpack.c.l.b16 %v776
    %v988 = vunpack.c.l.b16 %v777
    %v989 = vunpack.c.h.b16 %v777
    %v990 = vunpack.c.l.b16 %v778
    %v991 = vunpack.c.l.b16 %v779
    %v992 = vunpack.c.h.b16 %v779
    %v993 = vunpack.c.l.b16 %v780
    %v994 = vunpack.c.l.b16 %v781
    %v995 = vunpack.c.h.b16 %v781
    %v996 = vunpack.c.l.b16 %v782
    %v997 = vunpack.c.l.b16 %v783
    %v998 = vunpack.c.h.b16 %v783
    %v999 = vunpack.c.l.b16 %v784
    %v1000 = vunpack.c.l.b16 %v785
    %v1001 = vunpack.c.h.b16 %v785
    %v1002 = vunpack.c.l.b16 %v786
    %v1003 = vunpack.c.l.b16 %v787
    %v1004 = vunpack.c.h.b16 %v787
    %v1005 = vunpack.c.l.b16 %v788
    %v1006 = vunpack.c.l.b16 %v789
    %v1007 = vunpack.c.h.b16 %v789
    %v1008 = vunpack.c.l.b16 %v790
    %v1009 = vunpack.c.l.b16 %v791
    %v1010 = vunpack.c.h.b16 %v791
    %v1011 = vunpack.c.l.b16 %v792
    %v1012 = vunpack.c.l.b16 %v793
    %v1013 = vunpack.c.h.b16 %v793
    %v1014 = vunpack.c.l.b16 %v794
    %v1015 = vunpack.c.l.b16 %v795
    %v1016 = vunpack.c.h.b16 %v795
    %v1017 = vunpack.c.l.b16 %v796
    %v1018 = vunpack.c.l.b16 %v797
    %v1019 = vunpack.c.h.b16 %v797
    %v1020 = vunpack.c.l.b16 %v798
    %v1021 = vunpack.c.l.b16 %v799
    %v1022 = vunpack.c.h.b16 %v799
    %v1023 = vunpack.c.l.b16 %v800
    %v1024 = vunpack.c.l.b16 %v801
    %v1025 = vunpack.c.h.b16 %v801
    %v1026 = vunpack.c.l.b16 %v802
    %v1027 = vunpack.c.l.b16 %v803
    %v1028 = vunpack.c.h.b16 %v803
    %v1029 = vunpack.c.l.b16 %v804
    %v1030 = vunpack.c.l.b16 %v805
    %v1031 = vunpack.c.h.b16 %v805
    %v1032 = vunpack.c.l.b16 %v806
    %v1033 = vunpack.c.l.b16 %v807
    %v1034 = vunpack.c.h.b16 %v807
    %v1035 = vunpack.c.l.b16 %v808
    %v1036 = vunpack.c.l.b16 %v809
    %v1037 = vunpack.c.h.b16 %v809
    %v1038 = vunpack.c.l.b16 %v810
    %v1039 = vunpack.c.l.b16 %v811
    %v1040 = vunpack.c.h.b16 %v811
    %v1041 = vunpack.c.l.b16 %v812
    %v1042 = vunpack.c.l.b16 %v813
    %v1043 = vunpack.c.h.b16 %v813
    %v1044 = vunpack.c.l.b16 %v814
    %v1045 = vunpack.c.l.b16 %v815
    %v1046 = vunpack.c.h.b16 %v815
    %v1047 = vunpack.c.l.b16 %v816
    %v1048 = vunpack.c.l.b16 %v817
    %v1049 = vunpack.c.h.b16 %v817
    %v1050 = vunpack.c.l.b16 %v818
    %v1051 = vunpack.c.l.b16 %v819
    %v1052 = vunpack.c.h.b16 %v819
    %v1053 = vunpack.c.l.b16 %v820
    %v1054 = vunpack.c.l.b16 %v821
    %v1055 = vunpack.c.h.b16 %v821
    %v1056 = vunpack.c.l.b16 %v822
    %v1057 = vunpack.c.l.b16 %v823
    %v1058 = vunpack.c.h.b16 %v823
    %v1059 = vunpack.c.l.b16 %v824
    %v1060 = vunpack.c.l.b16 %v825
    %v1061 = vunpack.c.h.b16 %v825
    %v1062 = vunpack.c.l.b16 %v826
    %v1063 = vunpack.c.l.b16 %v827
    %v1064 = vunpack.c.h.b16 %v827
    %v1065 = vunpack.c.l.b16 %v828
    %v1066 = vunpack.c.l.b16 %v829
    %v1067 = vunpack.c.h.b16 %v829
    %v1068 = vunpack.c.l.b16 %v830
    %v1069 = vunpack.c.l.b16 %v831
    %v1070 = vunpack.c.h.b16 %v831
    %v1071 = vunpack.c.l.b16 %v832
    %v1072 = vunpack.c.l.b16 %v833
    %v1073 = vunpack.c.h.b16 %v833
    %v1074 = vunpack.c.l.b16 %v834
    %v1075 = vunpack.c.l.b16 %v835
    %v1076 = vunpack.c.h.b16 %v835
    %v1077 = vunpack.c.l.b16 %v836
    %v1078 = vunpack.c.l.b16 %v837
    %v1079 = vunpack.c.h.b16 %v837
    %v1080 = vunpack.c.l.b16 %v838
    %v1081 = vunpack.c.l.b16 %v839
    %v1082 = vunpack.c.h.b16 %v839
    %v1083 = vunpack.c.l.b16 %v840
    %v1084 = vunpack.c.l.b16 %v841
    %v1085 = vunpack.c.h.b16 %v841
    %v1086 = vunpack.c.l.b16 %v842
    %v1087 = vunpack.c.l.b16 %v843
    %v1088 = vunpack.c.h.b16 %v843
    %v1089 = vunpack.c.l.b16 %v844
    %v1090 = vunpack.c.l.b16 %v845
    %v1091 = vunpack.c.h.b16 %v845
    %v1092 = vunpack.c.l.b16 %v846
    %v1093 = vunpack.c.l.b16 %v847
    %v1094 = vunpack.c.h.b16 %v847
    %v1095 = vunpack.c.l.b16 %v848
    %v1096 = vunpack.c.l.b16 %v849
    %v1097 = vunpack.c.h.b16 %v849
    %v1098 = vunpack.c.l.b16 %v850
    %v1099 = vunpack.c.l.b16 %v851
    %v1100 = vunpack.c.h.b16 %v851
    %v1101 = vunpack.c.l.b16 %v852
    %v1102 = vunpack.c.l.b16 %v853
    %v1103 = vunpack.c.h.b16 %v853
    %v1104 = vunpack.c.l.b16 %v854
    %v1105 = vunpack.c.l.b16 %v855
    %v1106 = vunpack.c.h.b16 %v855
    %v1107 = vunpack.c.l.b16 %v856
    %v1108 = vunpack.c.l.b16 %v857
    %v1109 = vunpack.c.h.b16 %v857
    %v1110 = vunpack.c.l.b16 %v858
    %v1111 = vunpack.c.l.b16 %v859
    %v1112 = vunpack.c.h.b16 %v859
    %v1113 = vunpack.c.l.b16 %v860
    %v1114 = vunpack.c.l.b16 %v861
    %v1115 = vunpack.c.h.b16 %v861
    %v1116 = vunpack.c.l.b16 %v862
    %v1117 = vunpack.c.l.b16 %v863
    %v1118 = vunpack.c.h.b16 %v863
    %v1119 = vunpack.c.l.b16 %v864
    %v1120 = vunpack.c.l.b16 %v865
    %v1121 = vunpack.c.h.b16 %v865
    %v1122 = vunpack.c.l.b16 %v866
    %v1123 = vpack.c.b16 %v982, %v979
    %v1124 = vpack.c.b16 %v983, %v980
    %v1125 = vpack.c.b16 %v984, %v981
    %v1126 = vpack.c.b16 %v988, %v985
    %v1127 = vpack.c.b16 %v989, %v986
    %v1128 = vpack.c.b16 %v990, %v987
    %v1129 = vpack.c.b16 %v994, %v991
    %v1130 = vpack.c.b16 %v995, %v992
    %v1131 = vpack.c.b16 %v996, %v993
    %v1132 = vpack.c.b16 %v1000, %v997
    %v1133 = vpack.c.b16 %v1001, %v998
    %v1134 = vpack.c.b16 %v1002, %v999
    %v1135 = vpack.c.b16 %v1006, %v1003
    %v1136 = vpack.c.b16 %v1007, %v1004
    %v1137 = vpack.c.b16 %v1008, %v1005
    %v1138 = vpack.c.b16 %v1012, %v1009
    %v1139 = vpack.c.b16 %v1013, %v1010
    %v1140 = vpack.c.b16 %v1014, %v1011
    %v1141 = vpack.c.b16 %v1018, %v1015
    %v1142 = vpack.c.b16 %v1019, %v1016
    %v1143 = vpack.c.b16 %v1020, %v1017
    %v1144 = vpack.c.b16 %v1024, %v1021
    %v1145 = vpack.c.b16 %v1025, %v1022
    %v1146 = vpack.c.b16 %v1026, %v1023
    %v1147 = vpack.c.b16 %v1030, %v1027
    %v1148 = vpack.c.b16 %v1031, %v1028
    %v1149 = vpack.c.b16 %v1032, %v1029
    %v1150 = vpack.c.b16 %v1036, %v1033
    %v1151 = vpack.c.b16 %v1037, %v1034
    %v1152 = vpack.c.b16 %v1038, %v1035
    %v1153 = vpack.c.b16 %v1042, %v1039
    %v1154 = vpack.c.b16 %v1043, %v1040
    %v1155 = vpack.c.b16 %v1044, %v1041
    %v1156 = vpack.c.b16 %v1048, %v1045
    %v1157 = vpack.c.b16 %v1049, %v1046
    %v1158 = vpack.c.b16 %v1050, %v1047
    %v1159 = vpack.c.b16 %v1054, %v1051
    %v1160 = vpack.c.b16 %v1055, %v1052
    %v1161 = vpack.c.b16 %v1056, %v1053
    %v1162 = vpack.c.b16 %v1060, %v1057
    %v1163 = vpack.c.b16 %v1061, %v1058
    %v1164 = vpack.c.b16 %v1062, %v1059
    %v1165 = vpack.c.b16 %v1066, %v1063
    %v1166 = vpack.c.b16 %v1067, %v1064
    %v1167 = vpack.c.b16 %v1068, %v1065
    %v1168 = vpack.c.b16 %v1072, %v1069
    %v1169 = vpack.c.b16 %v1073, %v1070
    %v1170 = vpack.c.b16 %v1074, %v1071
    %v1171 = vpack.c.b16 %v1078, %v1075
    %v1172 = vpack.c.b16 %v1079, %v1076
    %v1173 = vpack.c.b16 %v1080, %v1077
    %v1174 = vpack.c.b16 %v1084, %v1081
    %v1175 = vpack.c.b16 %v1085, %v1082
    %v1176 = vpack.c.b16 %v1086, %v1083
    %v1177 = vpack.c.b16 %v1090, %v1087
    %v1178 = vpack.c.b16 %v1091, %v1088
    %v1179 = vpack.c.b16 %v1092, %v1089
    %v1180 = vpack.c.b16 %v1096, %v1093
    %v1181 = vpack.c.b16 %v1097, %v1094
    %v1182 = vpack.c.b16 %v1098, %v1095
    %v1183 = vpack.c.b16 %v1102, %v1099
    %v1184 = vpack.c.b16 %v1103, %v1100
    %v1185 = vpack.c.b16 %v1104, %v1101
    %v1186 = vpack.c.b16 %v1108, %v1105
    %v1187 = vpack.c.b16 %v1109, %v1106
    %v1188 = vpack.c.b16 %v1110, %v1107
    %v1189 = vpack.c.b16 %v1114, %v1111
    %v1190 = vpack.c.b16 %v1115, %v1112
    %v1191 = vpack.c.b16 %v1116, %v1113
    %v1192 = vpack.c.b16 %v1120, %v1117
    %v1193 = vpack.c.b16 %v1121, %v1118
    %v1194 = vpack.c.b16 %v1122, %v1119
    %1267 = vmatprep.subr.bf16.mxu0 %v1145
    %1268 = vmatpush1.bf16.msra.mxu0 %v1144
    %1269 = vmatprep.subr.bf16.mxu0 %v1142
    %1270 = vmatpush1.bf16.msra.mxu0 %v1141
    %1271 = vmatprep.subr.bf16.mxu0 %v1139
    %1272 = vmatpush1.bf16.msra.mxu0 %v1138
    %1273 = vmatprep.subr.bf16.mxu0 %v1136
    %1274 = vmatpush1.bf16.msra.mxu0 %v1135
    %1275 = vmatprep.subr.bf16.mxu0 %v1133
    %1276 = vmatpush1.bf16.msra.mxu0 %v1132
    %1277 = vmatprep.subr.bf16.mxu0 %v1130
    %1278 = vmatpush1.bf16.msra.mxu0 %v1129
    %1279 = vmatprep.subr.bf16.mxu0 %v1127
    %1280 = vmatpush1.bf16.msra.mxu0 %v1126
    %1281 = vmatprep.subr.bf16.mxu0 %v1124
    %1282 = vmatpush1.bf16.msra.mxu0 %v1123
    %1283 = vmatprep.subr.bf16.mxu0 %v1169
    %1284 = vmatpush2.bf16.msra.mxu0 %v1168
    %1285 = vmatprep.subr.bf16.mxu0 %v1166
    %1286 = vmatpush2.bf16.msra.mxu0 %v1165
    %1287 = vmatprep.subr.bf16.mxu0 %v1163
    %1288 = vmatpush2.bf16.msra.mxu0 %v1162
    %1289 = vmatprep.subr.bf16.mxu0 %v1160
    %1290 = vmatpush2.bf16.msra.mxu0 %v1159
    %1291 = vmatprep.subr.bf16.mxu0 %v1157
    %1292 = vmatpush2.bf16.msra.mxu0 %v1156
    %1293 = vmatprep.subr.bf16.mxu0 %v1154
    %1294 = vmatpush2.bf16.msra.mxu0 %v1153
    %1295 = vmatprep.subr.bf16.mxu0 %v1151
    %1296 = vmatpush2.bf16.msra.mxu0 %v1150
    %1297 = vmatprep.subr.bf16.mxu0 %v1148
    %1298 = vmatpush2.bf16.msra.mxu0 %v1147
    %1299 = vmatprep.mubr.bf16.mxu0 %v724
    %1300 = vmatmul.mubr.bf16.gmra.mxu0 %v723
    %v1301 = vpop.f32.mrf.mxu0
    %v1302 = vadd.f32 %v871, %v1301
    %v1303 = vpop.f32.mrf.mxu0
    %v1304 = vadd.f32 %v875, %v1303
    %v1305 = vpop.f32.mrf.mxu0
    %v1306 = vadd.f32 %v871, %v1305
    %v1307 = vpop.f32.mrf.mxu0
    %v1308 = vadd.f32 %v875, %v1307
    %1309 = vmatprep.mubr.bf16.mxu0 %v727
    %1310 = vmatmul.mubr.bf16.gmra.mxu0 %v726
    %v1311 = vpop.f32.mrf.mxu0
    %v1312 = vadd.f32 %v871, %v1311
    %v1313 = vpop.f32.mrf.mxu0
    %v1314 = vadd.f32 %v875, %v1313
    %v1315 = vpop.f32.mrf.mxu0
    %v1316 = vadd.f32 %v871, %v1315
    %v1317 = vpop.f32.mrf.mxu0
    %v1318 = vadd.f32 %v875, %v1317
    %1319 = vmatprep.mubr.bf16.mxu0 %v730
    %1320 = vmatmul.mubr.bf16.gmra.mxu0 %v729
    %v1321 = vpop.f32.mrf.mxu0
    %v1322 = vadd.f32 %v871, %v1321
    %v1323 = vpop.f32.mrf.mxu0
    %v1324 = vadd.f32 %v875, %v1323
    %v1325 = vpop.f32.mrf.mxu0
    %v1326 = vadd.f32 %v871, %v1325
    %v1327 = vpop.f32.mrf.mxu0
    %v1328 = vadd.f32 %v875, %v1327
    %1329 = vmatprep.mubr.bf16.mxu0 %v733
    %1330 = vmatmul.mubr.bf16.gmra.mxu0 %v732
    %v1331 = vpop.f32.mrf.mxu0
    %v1332 = vadd.f32 %v871, %v1331
    %v1333 = vpop.f32.mrf.mxu0
    %v1334 = vadd.f32 %v875, %v1333
    %v1335 = vpop.f32.mrf.mxu0
    %v1336 = vadd.f32 %v871, %v1335
    %v1337 = vpop.f32.mrf.mxu0
    %v1338 = vadd.f32 %v875, %v1337
    %1339 = vmatprep.mubr.bf16.mxu0 %v736
    %1340 = vmatmul.mubr.bf16.gmra.mxu0 %v735
    %v1341 = vpop.f32.mrf.mxu0
    %v1342 = vadd.f32 %v871, %v1341
    %v1343 = vpop.f32.mrf.mxu0
    %v1344 = vadd.f32 %v875, %v1343
    %v1345 = vpop.f32.mrf.mxu0
    %v1346 = vadd.f32 %v871, %v1345
    %v1347 = vpop.f32.mrf.mxu0
    %v1348 = vadd.f32 %v875, %v1347
    %1349 = vmatprep.mubr.bf16.mxu0 %v739
    %1350 = vmatmul.mubr.bf16.gmra.mxu0 %v738
    %v1351 = vpop.f32.mrf.mxu0
    %v1352 = vadd.f32 %v871, %v1351
    %v1353 = vpop.f32.mrf.mxu0
    %v1354 = vadd.f32 %v875, %v1353
    %v1355 = vpop.f32.mrf.mxu0
    %v1356 = vadd.f32 %v871, %v1355
    %v1357 = vpop.f32.mrf.mxu0
    %v1358 = vadd.f32 %v875, %v1357
    %1359 = vmatprep.mubr.bf16.mxu0 %v742
    %1360 = vmatmul.mubr.bf16.gmra.mxu0 %v741
    %v1361 = vpop.f32.mrf.mxu0
    %v1362 = vadd.f32 %v871, %v1361
    %v1363 = vpop.f32.mrf.mxu0
    %v1364 = vadd.f32 %v875, %v1363
    %v1365 = vpop.f32.mrf.mxu0
    %v1366 = vadd.f32 %v871, %v1365
    %v1367 = vpop.f32.mrf.mxu0
    %v1368 = vadd.f32 %v875, %v1367
    %1369 = vmatprep.mubr.bf16.mxu0 %v745
    %1370 = vmatmul.mubr.bf16.gmra.mxu0 %v744
    %v1371 = vpop.f32.mrf.mxu0
    %v1372 = vadd.f32 %v871, %v1371
    %v1373 = vpop.f32.mrf.mxu0
    %v1374 = vadd.f32 %v875, %v1373
    %v1375 = vpop.f32.mrf.mxu0
    %v1376 = vadd.f32 %v871, %v1375
    %v1377 = vpop.f32.mrf.mxu0
    %v1378 = vadd.f32 %v875, %v1377
    %1379 = vmatprep.mubr.bf16.mxu0 %v748
    %1380 = vmatmul.mubr.bf16.gmra.mxu0 %v747
    %v1381 = vpop.f32.mrf.mxu0
    %v1382 = vadd.f32 %v871, %v1381
    %v1383 = vpop.f32.mrf.mxu0
    %v1384 = vadd.f32 %v875, %v1383
    %v1385 = vpop.f32.mrf.mxu0
    %v1386 = vadd.f32 %v871, %v1385
    %v1387 = vpop.f32.mrf.mxu0
    %v1388 = vadd.f32 %v875, %v1387
    %1389 = vmatprep.mubr.bf16.mxu0 %v751
    %1390 = vmatmul.mubr.bf16.gmra.mxu0 %v750
    %v1391 = vpop.f32.mrf.mxu0
    %v1392 = vadd.f32 %v871, %v1391
    %v1393 = vpop.f32.mrf.mxu0
    %v1394 = vadd.f32 %v875, %v1393
    %v1395 = vpop.f32.mrf.mxu0
    %v1396 = vadd.f32 %v871, %v1395
    %v1397 = vpop.f32.mrf.mxu0
    %v1398 = vadd.f32 %v875, %v1397
    %1399 = vmatprep.mubr.bf16.mxu0 %v754
    %1400 = vmatmul.mubr.bf16.gmra.mxu0 %v753
    %v1401 = vpop.f32.mrf.mxu0
    %v1402 = vadd.f32 %v871, %v1401
    %v1403 = vpop.f32.mrf.mxu0
    %v1404 = vadd.f32 %v875, %v1403
    %v1405 = vpop.f32.mrf.mxu0
    %v1406 = vadd.f32 %v871, %v1405
    %v1407 = vpop.f32.mrf.mxu0
    %v1408 = vadd.f32 %v875, %v1407
    %1409 = vmatprep.mubr.bf16.mxu0 %v757
    %1410 = vmatmul.mubr.bf16.gmra.mxu0 %v756
    %v1411 = vpop.f32.mrf.mxu0
    %v1412 = vadd.f32 %v871, %v1411
    %v1413 = vpop.f32.mrf.mxu0
    %v1414 = vadd.f32 %v875, %v1413
    %v1415 = vpop.f32.mrf.mxu0
    %v1416 = vadd.f32 %v871, %v1415
    %v1417 = vpop.f32.mrf.mxu0
    %v1418 = vadd.f32 %v875, %v1417
    %1419 = vmatprep.mubr.bf16.mxu0 %v760
    %1420 = vmatmul.mubr.bf16.gmra.mxu0 %v759
    %v1421 = vpop.f32.mrf.mxu0
    %v1422 = vadd.f32 %v871, %v1421
    %v1423 = vpop.f32.mrf.mxu0
    %v1424 = vadd.f32 %v875, %v1423
    %v1425 = vpop.f32.mrf.mxu0
    %v1426 = vadd.f32 %v871, %v1425
    %v1427 = vpop.f32.mrf.mxu0
    %v1428 = vadd.f32 %v875, %v1427
    %1429 = vmatprep.mubr.bf16.mxu0 %v763
    %1430 = vmatmul.mubr.bf16.gmra.mxu0 %v762
    %v1431 = vpop.f32.mrf.mxu0
    %v1432 = vadd.f32 %v871, %v1431
    %v1433 = vpop.f32.mrf.mxu0
    %v1434 = vadd.f32 %v875, %v1433
    %v1435 = vpop.f32.mrf.mxu0
    %v1436 = vadd.f32 %v871, %v1435
    %v1437 = vpop.f32.mrf.mxu0
    %v1438 = vadd.f32 %v875, %v1437
    %1439 = vmatprep.mubr.bf16.mxu0 %v766
    %1440 = vmatmul.mubr.bf16.gmra.mxu0 %v765
    %v1441 = vpop.f32.mrf.mxu0
    %v1442 = vadd.f32 %v871, %v1441
    %v1443 = vpop.f32.mrf.mxu0
    %v1444 = vadd.f32 %v875, %v1443
    %v1445 = vpop.f32.mrf.mxu0
    %v1446 = vadd.f32 %v871, %v1445
    %v1447 = vpop.f32.mrf.mxu0
    %v1448 = vadd.f32 %v875, %v1447
    %1449 = vmatprep.mubr.bf16.mxu0 %v769
    %1450 = vmatmul.mubr.bf16.gmra.mxu0 %v768
    %v1451 = vpop.f32.mrf.mxu0
    %v1452 = vadd.f32 %v871, %v1451
    %v1453 = vpop.f32.mrf.mxu0
    %v1454 = vadd.f32 %v875, %v1453
    %v1455 = vpop.f32.mrf.mxu0
    %v1456 = vadd.f32 %v871, %v1455
    %v1457 = vpop.f32.mrf.mxu0
    %v1458 = vadd.f32 %v875, %v1457
    %1459 = vdwg.mxu0
    %1460 = vmatprep.subr.bf16.mxu0 %v1193
    %1461 = vmatpush1.bf16.msra.mxu0 %v1192
    %1462 = vmatprep.subr.bf16.mxu0 %v1190
    %1463 = vmatpush1.bf16.msra.mxu0 %v1189
    %1464 = vmatprep.subr.bf16.mxu0 %v1187
    %1465 = vmatpush1.bf16.msra.mxu0 %v1186
    %1466 = vmatprep.subr.bf16.mxu0 %v1184
    %1467 = vmatpush1.bf16.msra.mxu0 %v1183
    %1468 = vmatprep.subr.bf16.mxu0 %v1181
    %1469 = vmatpush1.bf16.msra.mxu0 %v1180
    %1470 = vmatprep.subr.bf16.mxu0 %v1178
    %1471 = vmatpush1.bf16.msra.mxu0 %v1177
    %1472 = vmatprep.subr.bf16.mxu0 %v1175
    %1473 = vmatpush1.bf16.msra.mxu0 %v1174
    %1474 = vmatprep.subr.bf16.mxu0 %v1172
    %1475 = vmatpush1.bf16.msra.mxu0 %v1171
    %1476 = vmatprep.subr.bf16.mxu0 0
    %1477 = vmatpush2.bf16.msra.mxu0 0
    %1478 = vmatprep.subr.bf16.mxu0 0
    %1479 = vmatpush2.bf16.msra.mxu0 0
    %1480 = vmatprep.subr.bf16.mxu0 0
    %1481 = vmatpush2.bf16.msra.mxu0 0
    %1482 = vmatprep.subr.bf16.mxu0 0
    %1483 = vmatpush2.bf16.msra.mxu0 0
    %1484 = vmatprep.subr.bf16.mxu0 0
    %1485 = vmatpush2.bf16.msra.mxu0 0
    %1486 = vmatprep.subr.bf16.mxu0 0
    %1487 = vmatpush2.bf16.msra.mxu0 0
    %1488 = vmatprep.subr.bf16.mxu0 0
    %1489 = vmatpush2.bf16.msra.mxu0 0
    %1490 = vmatprep.subr.bf16.mxu0 0
    %1491 = vmatpush2.bf16.msra.mxu0 0
    %1492 = vmatprep.mubr.bf16.mxu0 0
    %1493 = vmatmul.mubr.bf16.gmra.mxu0 %v725
    %v1494 = vpop.f32.mrf.mxu0
    %v1495 = vadd.f32 %v1302, %v1494
    %v1496 = vpop.f32.mrf.mxu0
    %v1497 = vadd.f32 %v1304, %v1496
    %v1498 = vpop.f32.mrf.mxu0
    %v1499 = vadd.f32 %v1306, %v1498
    %v1500 = vpop.f32.mrf.mxu0
    %v1501 = vadd.f32 %v1308, %v1500
    %1502 = vmatprep.mubr.bf16.mxu0 0
    %1503 = vmatmul.mubr.bf16.gmra.mxu0 %v728
    %v1504 = vpop.f32.mrf.mxu0
    %v1505 = vadd.f32 %v1312, %v1504
    %v1506 = vpop.f32.mrf.mxu0
    %v1507 = vadd.f32 %v1314, %v1506
    %v1508 = vpop.f32.mrf.mxu0
    %v1509 = vadd.f32 %v1316, %v1508
    %v1510 = vpop.f32.mrf.mxu0
    %v1511 = vadd.f32 %v1318, %v1510
    %1512 = vmatprep.mubr.bf16.mxu0 0
    %1513 = vmatmul.mubr.bf16.gmra.mxu0 %v731
    %v1514 = vpop.f32.mrf.mxu0
    %v1515 = vadd.f32 %v1322, %v1514
    %v1516 = vpop.f32.mrf.mxu0
    %v1517 = vadd.f32 %v1324, %v1516
    %v1518 = vpop.f32.mrf.mxu0
    %v1519 = vadd.f32 %v1326, %v1518
    %v1520 = vpop.f32.mrf.mxu0
    %v1521 = vadd.f32 %v1328, %v1520
    %1522 = vmatprep.mubr.bf16.mxu0 0
    %1523 = vmatmul.mubr.bf16.gmra.mxu0 %v734
    %v1524 = vpop.f32.mrf.mxu0
    %v1525 = vadd.f32 %v1332, %v1524
    %v1526 = vpop.f32.mrf.mxu0
    %v1527 = vadd.f32 %v1334, %v1526
    %v1528 = vpop.f32.mrf.mxu0
    %v1529 = vadd.f32 %v1336, %v1528
    %v1530 = vpop.f32.mrf.mxu0
    %v1531 = vadd.f32 %v1338, %v1530
    %1532 = vmatprep.mubr.bf16.mxu0 0
    %1533 = vmatmul.mubr.bf16.gmra.mxu0 %v737
    %v1534 = vpop.f32.mrf.mxu0
    %v1535 = vadd.f32 %v1342, %v1534
    %v1536 = vpop.f32.mrf.mxu0
    %v1537 = vadd.f32 %v1344, %v1536
    %v1538 = vpop.f32.mrf.mxu0
    %v1539 = vadd.f32 %v1346, %v1538
    %v1540 = vpop.f32.mrf.mxu0
    %v1541 = vadd.f32 %v1348, %v1540
    %1542 = vmatprep.mubr.bf16.mxu0 0
    %1543 = vmatmul.mubr.bf16.gmra.mxu0 %v740
    %v1544 = vpop.f32.mrf.mxu0
    %v1545 = vadd.f32 %v1352, %v1544
    %v1546 = vpop.f32.mrf.mxu0
    %v1547 = vadd.f32 %v1354, %v1546
    %v1548 = vpop.f32.mrf.mxu0
    %v1549 = vadd.f32 %v1356, %v1548
    %v1550 = vpop.f32.mrf.mxu0
    %v1551 = vadd.f32 %v1358, %v1550
    %1552 = vmatprep.mubr.bf16.mxu0 0
    %1553 = vmatmul.mubr.bf16.gmra.mxu0 %v743
    %v1554 = vpop.f32.mrf.mxu0
    %v1555 = vadd.f32 %v1362, %v1554
    %v1556 = vpop.f32.mrf.mxu0
    %v1557 = vadd.f32 %v1364, %v1556
    %v1558 = vpop.f32.mrf.mxu0
    %v1559 = vadd.f32 %v1366, %v1558
    %v1560 = vpop.f32.mrf.mxu0
    %v1561 = vadd.f32 %v1368, %v1560
    %1562 = vmatprep.mubr.bf16.mxu0 0
    %1563 = vmatmul.mubr.bf16.gmra.mxu0 %v746
    %v1564 = vpop.f32.mrf.mxu0
    %v1565 = vadd.f32 %v1372, %v1564
    %v1566 = vpop.f32.mrf.mxu0
    %v1567 = vadd.f32 %v1374, %v1566
    %v1568 = vpop.f32.mrf.mxu0
    %v1569 = vadd.f32 %v1376, %v1568
    %v1570 = vpop.f32.mrf.mxu0
    %v1571 = vadd.f32 %v1378, %v1570
    %1572 = vmatprep.mubr.bf16.mxu0 0
    %1573 = vmatmul.mubr.bf16.gmra.mxu0 %v749
    %v1574 = vpop.f32.mrf.mxu0
    %v1575 = vadd.f32 %v1382, %v1574
    %v1576 = vpop.f32.mrf.mxu0
    %v1577 = vadd.f32 %v1384, %v1576
    %v1578 = vpop.f32.mrf.mxu0
    %v1579 = vadd.f32 %v1386, %v1578
    %v1580 = vpop.f32.mrf.mxu0
    %v1581 = vadd.f32 %v1388, %v1580
    %1582 = vmatprep.mubr.bf16.mxu0 0
    %1583 = vmatmul.mubr.bf16.gmra.mxu0 %v752
    %v1584 = vpop.f32.mrf.mxu0
    %v1585 = vadd.f32 %v1392, %v1584
    %v1586 = vpop.f32.mrf.mxu0
    %v1587 = vadd.f32 %v1394, %v1586
    %v1588 = vpop.f32.mrf.mxu0
    %v1589 = vadd.f32 %v1396, %v1588
    %v1590 = vpop.f32.mrf.mxu0
    %v1591 = vadd.f32 %v1398, %v1590
    %1592 = vmatprep.mubr.bf16.mxu0 0
    %1593 = vmatmul.mubr.bf16.gmra.mxu0 %v755
    %v1594 = vpop.f32.mrf.mxu0
    %v1595 = vadd.f32 %v1402, %v1594
    %v1596 = vpop.f32.mrf.mxu0
    %v1597 = vadd.f32 %v1404, %v1596
    %v1598 = vpop.f32.mrf.mxu0
    %v1599 = vadd.f32 %v1406, %v1598
    %v1600 = vpop.f32.mrf.mxu0
    %v1601 = vadd.f32 %v1408, %v1600
    %1602 = vmatprep.mubr.bf16.mxu0 0
    %1603 = vmatmul.mubr.bf16.gmra.mxu0 %v758
    %v1604 = vpop.f32.mrf.mxu0
    %v1605 = vadd.f32 %v1412, %v1604
    %v1606 = vpop.f32.mrf.mxu0
    %v1607 = vadd.f32 %v1414, %v1606
    %v1608 = vpop.f32.mrf.mxu0
    %v1609 = vadd.f32 %v1416, %v1608
    %v1610 = vpop.f32.mrf.mxu0
    %v1611 = vadd.f32 %v1418, %v1610
    %1612 = vmatprep.mubr.bf16.mxu0 0
    %1613 = vmatmul.mubr.bf16.gmra.mxu0 %v761
    %v1614 = vpop.f32.mrf.mxu0
    %v1615 = vadd.f32 %v1422, %v1614
    %v1616 = vpop.f32.mrf.mxu0
    %v1617 = vadd.f32 %v1424, %v1616
    %v1618 = vpop.f32.mrf.mxu0
    %v1619 = vadd.f32 %v1426, %v1618
    %v1620 = vpop.f32.mrf.mxu0
    %v1621 = vadd.f32 %v1428, %v1620
    %1622 = vmatprep.mubr.bf16.mxu0 0
    %1623 = vmatmul.mubr.bf16.gmra.mxu0 %v764
    %v1624 = vpop.f32.mrf.mxu0
    %v1625 = vadd.f32 %v1432, %v1624
    %v1626 = vpop.f32.mrf.mxu0
    %v1627 = vadd.f32 %v1434, %v1626
    %v1628 = vpop.f32.mrf.mxu0
    %v1629 = vadd.f32 %v1436, %v1628
    %v1630 = vpop.f32.mrf.mxu0
    %v1631 = vadd.f32 %v1438, %v1630
    %1632 = vmatprep.mubr.bf16.mxu0 0
    %1633 = vmatmul.mubr.bf16.gmra.mxu0 %v767
    %v1634 = vpop.f32.mrf.mxu0
    %v1635 = vadd.f32 %v1442, %v1634
    %v1636 = vpop.f32.mrf.mxu0
    %v1637 = vadd.f32 %v1444, %v1636
    %v1638 = vpop.f32.mrf.mxu0
    %v1639 = vadd.f32 %v1446, %v1638
    %v1640 = vpop.f32.mrf.mxu0
    %v1641 = vadd.f32 %v1448, %v1640
    %1642 = vmatprep.mubr.bf16.mxu0 0
    %1643 = vmatmul.mubr.bf16.gmra.mxu0 %v770
    %v1644 = vpop.f32.mrf.mxu0
    %v1645 = vadd.f32 %v1452, %v1644
    %v1646 = vpop.f32.mrf.mxu0
    %v1647 = vadd.f32 %v1454, %v1646
    %v1648 = vpop.f32.mrf.mxu0
    %v1649 = vadd.f32 %v1456, %v1648
    %v1650 = vpop.f32.mrf.mxu0
    %v1651 = vadd.f32 %v1458, %v1650
    %1652 = vdwg.mxu0
    %1653 = vmatprep.subr.bf16.mxu0 0
    %1654 = vmatpush1.bf16.msra.mxu0 %v1146
    %1655 = vmatprep.subr.bf16.mxu0 0
    %1656 = vmatpush1.bf16.msra.mxu0 %v1143
    %1657 = vmatprep.subr.bf16.mxu0 0
    %1658 = vmatpush1.bf16.msra.mxu0 %v1140
    %1659 = vmatprep.subr.bf16.mxu0 0
    %1660 = vmatpush1.bf16.msra.mxu0 %v1137
    %1661 = vmatprep.subr.bf16.mxu0 0
    %1662 = vmatpush1.bf16.msra.mxu0 %v1134
    %1663 = vmatprep.subr.bf16.mxu0 0
    %1664 = vmatpush1.bf16.msra.mxu0 %v1131
    %1665 = vmatprep.subr.bf16.mxu0 0
    %1666 = vmatpush1.bf16.msra.mxu0 %v1128
    %1667 = vmatprep.subr.bf16.mxu0 0
    %1668 = vmatpush1.bf16.msra.mxu0 %v1125
    %1669 = vmatprep.subr.bf16.mxu0 0
    %1670 = vmatpush2.bf16.msra.mxu0 %v1170
    %1671 = vmatprep.subr.bf16.mxu0 0
    %1672 = vmatpush2.bf16.msra.mxu0 %v1167
    %1673 = vmatprep.subr.bf16.mxu0 0
    %1674 = vmatpush2.bf16.msra.mxu0 %v1164
    %1675 = vmatprep.subr.bf16.mxu0 0
    %1676 = vmatpush2.bf16.msra.mxu0 %v1161
    %1677 = vmatprep.subr.bf16.mxu0 0
    %1678 = vmatpush2.bf16.msra.mxu0 %v1158
    %1679 = vmatprep.subr.bf16.mxu0 0
    %1680 = vmatpush2.bf16.msra.mxu0 %v1155
    %1681 = vmatprep.subr.bf16.mxu0 0
    %1682 = vmatpush2.bf16.msra.mxu0 %v1152
    %1683 = vmatprep.subr.bf16.mxu0 0
    %1684 = vmatpush2.bf16.msra.mxu0 %v1149
    %1685 = vmatprep.mubr.bf16.mxu0 %v724
    %1686 = vmatmul.mubr.bf16.gmra.mxu0 %v723
    %v1687 = vpop.f32.mrf.mxu0
    %v1688 = vadd.f32 %v879, %v1687
    %v1689 = vpop.f32.mrf.mxu0
    %v1690 = vpop.f32.mrf.mxu0
    %v1691 = vadd.f32 %v879, %v1690
    %v1692 = vpop.f32.mrf.mxu0
    %1693 = vmatprep.mubr.bf16.mxu0 %v727
    %1694 = vmatmul.mubr.bf16.gmra.mxu0 %v726
    %v1695 = vpop.f32.mrf.mxu0
    %v1696 = vadd.f32 %v879, %v1695
    %v1697 = vpop.f32.mrf.mxu0
    %v1698 = vpop.f32.mrf.mxu0
    %v1699 = vadd.f32 %v879, %v1698
    %v1700 = vpop.f32.mrf.mxu0
    %1701 = vmatprep.mubr.bf16.mxu0 %v730
    %1702 = vmatmul.mubr.bf16.gmra.mxu0 %v729
    %v1703 = vpop.f32.mrf.mxu0
    %v1704 = vadd.f32 %v879, %v1703
    %v1705 = vpop.f32.mrf.mxu0
    %v1706 = vpop.f32.mrf.mxu0
    %v1707 = vadd.f32 %v879, %v1706
    %v1708 = vpop.f32.mrf.mxu0
    %1709 = vmatprep.mubr.bf16.mxu0 %v733
    %1710 = vmatmul.mubr.bf16.gmra.mxu0 %v732
    %v1711 = vpop.f32.mrf.mxu0
    %v1712 = vadd.f32 %v879, %v1711
    %v1713 = vpop.f32.mrf.mxu0
    %v1714 = vpop.f32.mrf.mxu0
    %v1715 = vadd.f32 %v879, %v1714
    %v1716 = vpop.f32.mrf.mxu0
    %1717 = vmatprep.mubr.bf16.mxu0 %v736
    %1718 = vmatmul.mubr.bf16.gmra.mxu0 %v735
    %v1719 = vpop.f32.mrf.mxu0
    %v1720 = vadd.f32 %v879, %v1719
    %v1721 = vpop.f32.mrf.mxu0
    %v1722 = vpop.f32.mrf.mxu0
    %v1723 = vadd.f32 %v879, %v1722
    %v1724 = vpop.f32.mrf.mxu0
    %1725 = vmatprep.mubr.bf16.mxu0 %v739
    %1726 = vmatmul.mubr.bf16.gmra.mxu0 %v738
    %v1727 = vpop.f32.mrf.mxu0
    %v1728 = vadd.f32 %v879, %v1727
    %v1729 = vpop.f32.mrf.mxu0
    %v1730 = vpop.f32.mrf.mxu0
    %v1731 = vadd.f32 %v879, %v1730
    %v1732 = vpop.f32.mrf.mxu0
    %1733 = vmatprep.mubr.bf16.mxu0 %v742
    %1734 = vmatmul.mubr.bf16.gmra.mxu0 %v741
    %v1735 = vpop.f32.mrf.mxu0
    %v1736 = vadd.f32 %v879, %v1735
    %v1737 = vpop.f32.mrf.mxu0
    %v1738 = vpop.f32.mrf.mxu0
    %v1739 = vadd.f32 %v879, %v1738
    %v1740 = vpop.f32.mrf.mxu0
    %1741 = vmatprep.mubr.bf16.mxu0 %v745
    %1742 = vmatmul.mubr.bf16.gmra.mxu0 %v744
    %v1743 = vpop.f32.mrf.mxu0
    %v1744 = vadd.f32 %v879, %v1743
    %v1745 = vpop.f32.mrf.mxu0
    %v1746 = vpop.f32.mrf.mxu0
    %v1747 = vadd.f32 %v879, %v1746
    %v1748 = vpop.f32.mrf.mxu0
    %1749 = vmatprep.mubr.bf16.mxu0 %v748
    %1750 = vmatmul.mubr.bf16.gmra.mxu0 %v747
    %v1751 = vpop.f32.mrf.mxu0
    %v1752 = vadd.f32 %v879, %v1751
    %v1753 = vpop.f32.mrf.mxu0
    %v1754 = vpop.f32.mrf.mxu0
    %v1755 = vadd.f32 %v879, %v1754
    %v1756 = vpop.f32.mrf.mxu0
    %1757 = vmatprep.mubr.bf16.mxu0 %v751
    %1758 = vmatmul.mubr.bf16.gmra.mxu0 %v750
    %v1759 = vpop.f32.mrf.mxu0
    %v1760 = vadd.f32 %v879, %v1759
    %v1761 = vpop.f32.mrf.mxu0
    %v1762 = vpop.f32.mrf.mxu0
    %v1763 = vadd.f32 %v879, %v1762
    %v1764 = vpop.f32.mrf.mxu0
    %1765 = vmatprep.mubr.bf16.mxu0 %v754
    %1766 = vmatmul.mubr.bf16.gmra.mxu0 %v753
    %v1767 = vpop.f32.mrf.mxu0
    %v1768 = vadd.f32 %v879, %v1767
    %v1769 = vpop.f32.mrf.mxu0
    %v1770 = vpop.f32.mrf.mxu0
    %v1771 = vadd.f32 %v879, %v1770
    %v1772 = vpop.f32.mrf.mxu0
    %1773 = vmatprep.mubr.bf16.mxu0 %v757
    %1774 = vmatmul.mubr.bf16.gmra.mxu0 %v756
    %v1775 = vpop.f32.mrf.mxu0
    %v1776 = vadd.f32 %v879, %v1775
    %v1777 = vpop.f32.mrf.mxu0
    %v1778 = vpop.f32.mrf.mxu0
    %v1779 = vadd.f32 %v879, %v1778
    %v1780 = vpop.f32.mrf.mxu0
    %1781 = vmatprep.mubr.bf16.mxu0 %v760
    %1782 = vmatmul.mubr.bf16.gmra.mxu0 %v759
    %v1783 = vpop.f32.mrf.mxu0
    %v1784 = vadd.f32 %v879, %v1783
    %v1785 = vpop.f32.mrf.mxu0
    %v1786 = vpop.f32.mrf.mxu0
    %v1787 = vadd.f32 %v879, %v1786
    %v1788 = vpop.f32.mrf.mxu0
    %1789 = vmatprep.mubr.bf16.mxu0 %v763
    %1790 = vmatmul.mubr.bf16.gmra.mxu0 %v762
    %v1791 = vpop.f32.mrf.mxu0
    %v1792 = vadd.f32 %v879, %v1791
    %v1793 = vpop.f32.mrf.mxu0
    %v1794 = vpop.f32.mrf.mxu0
    %v1795 = vadd.f32 %v879, %v1794
    %v1796 = vpop.f32.mrf.mxu0
    %1797 = vmatprep.mubr.bf16.mxu0 %v766
    %1798 = vmatmul.mubr.bf16.gmra.mxu0 %v765
    %v1799 = vpop.f32.mrf.mxu0
    %v1800 = vadd.f32 %v879, %v1799
    %v1801 = vpop.f32.mrf.mxu0
    %v1802 = vpop.f32.mrf.mxu0
    %v1803 = vadd.f32 %v879, %v1802
    %v1804 = vpop.f32.mrf.mxu0
    %1805 = vmatprep.mubr.bf16.mxu0 %v769
    %1806 = vmatmul.mubr.bf16.gmra.mxu0 %v768
    %v1807 = vpop.f32.mrf.mxu0
    %v1808 = vadd.f32 %v879, %v1807
    %v1809 = vpop.f32.mrf.mxu0
    %v1810 = vpop.f32.mrf.mxu0
    %v1811 = vadd.f32 %v879, %v1810
    %v1812 = vpop.f32.mrf.mxu0
    %1813 = vdwg.mxu0
    %1814 = vmatprep.subr.bf16.mxu0 0
    %1815 = vmatpush1.bf16.msra.mxu0 %v1194
    %1816 = vmatprep.subr.bf16.mxu0 0
    %1817 = vmatpush1.bf16.msra.mxu0 %v1191
    %1818 = vmatprep.subr.bf16.mxu0 0
    %1819 = vmatpush1.bf16.msra.mxu0 %v1188
    %1820 = vmatprep.subr.bf16.mxu0 0
    %1821 = vmatpush1.bf16.msra.mxu0 %v1185
    %1822 = vmatprep.subr.bf16.mxu0 0
    %1823 = vmatpush1.bf16.msra.mxu0 %v1182
    %1824 = vmatprep.subr.bf16.mxu0 0
    %1825 = vmatpush1.bf16.msra.mxu0 %v1179
    %1826 = vmatprep.subr.bf16.mxu0 0
    %1827 = vmatpush1.bf16.msra.mxu0 %v1176
    %1828 = vmatprep.subr.bf16.mxu0 0
    %1829 = vmatpush1.bf16.msra.mxu0 %v1173
    %1830 = vmatprep.subr.bf16.mxu0 0
    %1831 = vmatpush2.bf16.msra.mxu0 0
    %1832 = vmatprep.subr.bf16.mxu0 0
    %1833 = vmatpush2.bf16.msra.mxu0 0
    %1834 = vmatprep.subr.bf16.mxu0 0
    %1835 = vmatpush2.bf16.msra.mxu0 0
    %1836 = vmatprep.subr.bf16.mxu0 0
    %1837 = vmatpush2.bf16.msra.mxu0 0
    %1838 = vmatprep.subr.bf16.mxu0 0
    %1839 = vmatpush2.bf16.msra.mxu0 0
    %1840 = vmatprep.subr.bf16.mxu0 0
    %1841 = vmatpush2.bf16.msra.mxu0 0
    %1842 = vmatprep.subr.bf16.mxu0 0
    %1843 = vmatpush2.bf16.msra.mxu0 0
    %1844 = vmatprep.subr.bf16.mxu0 0
    %1845 = vmatpush2.bf16.msra.mxu0 0
    %1846 = vmatprep.mubr.bf16.mxu0 0
    %1847 = vmatmul.mubr.bf16.gmra.mxu0 %v725
    %v1848 = vpop.f32.mrf.mxu0
    %v1849 = vadd.f32 %v1688, %v1848
    %v1850 = vpop.f32.mrf.mxu0
    %v1851 = vpop.f32.mrf.mxu0
    %v1852 = vadd.f32 %v1691, %v1851
    %v1853 = vpop.f32.mrf.mxu0
    %1854 = vmatprep.mubr.bf16.mxu0 0
    %1855 = vmatmul.mubr.bf16.gmra.mxu0 %v728
    %v1856 = vpop.f32.mrf.mxu0
    %v1857 = vadd.f32 %v1696, %v1856
    %v1858 = vpop.f32.mrf.mxu0
    %v1859 = vpop.f32.mrf.mxu0
    %v1860 = vadd.f32 %v1699, %v1859
    %v1861 = vpop.f32.mrf.mxu0
    %1862 = vmatprep.mubr.bf16.mxu0 0
    %1863 = vmatmul.mubr.bf16.gmra.mxu0 %v731
    %v1864 = vpop.f32.mrf.mxu0
    %v1865 = vadd.f32 %v1704, %v1864
    %v1866 = vpop.f32.mrf.mxu0
    %v1867 = vpop.f32.mrf.mxu0
    %v1868 = vadd.f32 %v1707, %v1867
    %v1869 = vpop.f32.mrf.mxu0
    %1870 = vmatprep.mubr.bf16.mxu0 0
    %1871 = vmatmul.mubr.bf16.gmra.mxu0 %v734
    %v1872 = vpop.f32.mrf.mxu0
    %v1873 = vadd.f32 %v1712, %v1872
    %v1874 = vpop.f32.mrf.mxu0
    %v1875 = vpop.f32.mrf.mxu0
    %v1876 = vadd.f32 %v1715, %v1875
    %v1877 = vpop.f32.mrf.mxu0
    %1878 = vmatprep.mubr.bf16.mxu0 0
    %1879 = vmatmul.mubr.bf16.gmra.mxu0 %v737
    %v1880 = vpop.f32.mrf.mxu0
    %v1881 = vadd.f32 %v1720, %v1880
    %v1882 = vpop.f32.mrf.mxu0
    %v1883 = vpop.f32.mrf.mxu0
    %v1884 = vadd.f32 %v1723, %v1883
    %v1885 = vpop.f32.mrf.mxu0
    %1886 = vmatprep.mubr.bf16.mxu0 0
    %1887 = vmatmul.mubr.bf16.gmra.mxu0 %v740
    %v1888 = vpop.f32.mrf.mxu0
    %v1889 = vadd.f32 %v1728, %v1888
    %v1890 = vpop.f32.mrf.mxu0
    %v1891 = vpop.f32.mrf.mxu0
    %v1892 = vadd.f32 %v1731, %v1891
    %v1893 = vpop.f32.mrf.mxu0
    %1894 = vmatprep.mubr.bf16.mxu0 0
    %1895 = vmatmul.mubr.bf16.gmra.mxu0 %v743
    %v1896 = vpop.f32.mrf.mxu0
    %v1897 = vadd.f32 %v1736, %v1896
    %v1898 = vpop.f32.mrf.mxu0
    %v1899 = vpop.f32.mrf.mxu0
    %v1900 = vadd.f32 %v1739, %v1899
    %v1901 = vpop.f32.mrf.mxu0
    %1902 = vmatprep.mubr.bf16.mxu0 0
    %1903 = vmatmul.mubr.bf16.gmra.mxu0 %v746
    %v1904 = vpop.f32.mrf.mxu0
    %v1905 = vadd.f32 %v1744, %v1904
    %v1906 = vpop.f32.mrf.mxu0
    %v1907 = vpop.f32.mrf.mxu0
    %v1908 = vadd.f32 %v1747, %v1907
    %v1909 = vpop.f32.mrf.mxu0
    %1910 = vmatprep.mubr.bf16.mxu0 0
    %1911 = vmatmul.mubr.bf16.gmra.mxu0 %v749
    %v1912 = vpop.f32.mrf.mxu0
    %v1913 = vadd.f32 %v1752, %v1912
    %v1914 = vpop.f32.mrf.mxu0
    %v1915 = vpop.f32.mrf.mxu0
    %v1916 = vadd.f32 %v1755, %v1915
    %v1917 = vpop.f32.mrf.mxu0
    %1918 = vmatprep.mubr.bf16.mxu0 0
    %1919 = vmatmul.mubr.bf16.gmra.mxu0 %v752
    %v1920 = vpop.f32.mrf.mxu0
    %v1921 = vadd.f32 %v1760, %v1920
    %v1922 = vpop.f32.mrf.mxu0
    %v1923 = vpop.f32.mrf.mxu0
    %v1924 = vadd.f32 %v1763, %v1923
    %v1925 = vpop.f32.mrf.mxu0
    %1926 = vmatprep.mubr.bf16.mxu0 0
    %1927 = vmatmul.mubr.bf16.gmra.mxu0 %v755
    %v1928 = vpop.f32.mrf.mxu0
    %v1929 = vadd.f32 %v1768, %v1928
    %v1930 = vpop.f32.mrf.mxu0
    %v1931 = vpop.f32.mrf.mxu0
    %v1932 = vadd.f32 %v1771, %v1931
    %v1933 = vpop.f32.mrf.mxu0
    %1934 = vmatprep.mubr.bf16.mxu0 0
    %1935 = vmatmul.mubr.bf16.gmra.mxu0 %v758
    %v1936 = vpop.f32.mrf.mxu0
    %v1937 = vadd.f32 %v1776, %v1936
    %v1938 = vpop.f32.mrf.mxu0
    %v1939 = vpop.f32.mrf.mxu0
    %v1940 = vadd.f32 %v1779, %v1939
    %v1941 = vpop.f32.mrf.mxu0
    %1942 = vmatprep.mubr.bf16.mxu0 0
    %1943 = vmatmul.mubr.bf16.gmra.mxu0 %v761
    %v1944 = vpop.f32.mrf.mxu0
    %v1945 = vadd.f32 %v1784, %v1944
    %v1946 = vpop.f32.mrf.mxu0
    %v1947 = vpop.f32.mrf.mxu0
    %v1948 = vadd.f32 %v1787, %v1947
    %v1949 = vpop.f32.mrf.mxu0
    %1950 = vmatprep.mubr.bf16.mxu0 0
    %1951 = vmatmul.mubr.bf16.gmra.mxu0 %v764
    %v1952 = vpop.f32.mrf.mxu0
    %v1953 = vadd.f32 %v1792, %v1952
    %v1954 = vpop.f32.mrf.mxu0
    %v1955 = vpop.f32.mrf.mxu0
    %v1956 = vadd.f32 %v1795, %v1955
    %v1957 = vpop.f32.mrf.mxu0
    %1958 = vmatprep.mubr.bf16.mxu0 0
    %1959 = vmatmul.mubr.bf16.gmra.mxu0 %v767
    %v1960 = vpop.f32.mrf.mxu0
    %v1961 = vadd.f32 %v1800, %v1960
    %v1962 = vpop.f32.mrf.mxu0
    %v1963 = vpop.f32.mrf.mxu0
    %v1964 = vadd.f32 %v1803, %v1963
    %v1965 = vpop.f32.mrf.mxu0
    %1966 = vmatprep.mubr.bf16.mxu0 0
    %1967 = vmatmul.mubr.bf16.gmra.mxu0 %v770
    %v1968 = vpop.f32.mrf.mxu0
    %v1969 = vadd.f32 %v1808, %v1968
    %v1970 = vpop.f32.mrf.mxu0
    %v1971 = vpop.f32.mrf.mxu0
    %v1972 = vadd.f32 %v1811, %v1971
    %v1973 = vpop.f32.mrf.mxu0
    %1974 = vdwg.mxu0
    %v1975 = vmax.f32 %v1495, 0.0
    %v1976 = vmax.f32 %v1497, 0.0
    %v1977 = vmax.f32 %v1849, 0.0
    %v1978 = vmax.f32 %v1499, 0.0
    %v1979 = vmax.f32 %v1501, 0.0
    %v1980 = vmax.f32 %v1852, 0.0
    %v1981 = vmax.f32 %v1505, 0.0
    %v1982 = vmax.f32 %v1507, 0.0
    %v1983 = vmax.f32 %v1857, 0.0
    %v1984 = vmax.f32 %v1509, 0.0
    %v1985 = vmax.f32 %v1511, 0.0
    %v1986 = vmax.f32 %v1860, 0.0
    %v1987 = vmax.f32 %v1515, 0.0
    %v1988 = vmax.f32 %v1517, 0.0
    %v1989 = vmax.f32 %v1865, 0.0
    %v1990 = vmax.f32 %v1519, 0.0
    %v1991 = vmax.f32 %v1521, 0.0
    %v1992 = vmax.f32 %v1868, 0.0
    %v1993 = vmax.f32 %v1525, 0.0
    %v1994 = vmax.f32 %v1527, 0.0
    %v1995 = vmax.f32 %v1873, 0.0
    %v1996 = vmax.f32 %v1529, 0.0
    %v1997 = vmax.f32 %v1531, 0.0
    %v1998 = vmax.f32 %v1876, 0.0
    %v1999 = vmax.f32 %v1535, 0.0
    %v2000 = vmax.f32 %v1537, 0.0
    %v2001 = vmax.f32 %v1881, 0.0
    %v2002 = vmax.f32 %v1539, 0.0
    %v2003 = vmax.f32 %v1541, 0.0
    %v2004 = vmax.f32 %v1884, 0.0
    %v2005 = vmax.f32 %v1545, 0.0
    %v2006 = vmax.f32 %v1547, 0.0
    %v2007 = vmax.f32 %v1889, 0.0
    %v2008 = vmax.f32 %v1549, 0.0
    %v2009 = vmax.f32 %v1551, 0.0
    %v2010 = vmax.f32 %v1892, 0.0
    %v2011 = vmax.f32 %v1555, 0.0
    %v2012 = vmax.f32 %v1557, 0.0
    %v2013 = vmax.f32 %v1897, 0.0
    %v2014 = vmax.f32 %v1559, 0.0
    %v2015 = vmax.f32 %v1561, 0.0
    %v2016 = vmax.f32 %v1900, 0.0
    %v2017 = vmax.f32 %v1565, 0.0
    %v2018 = vmax.f32 %v1567, 0.0
    %v2019 = vmax.f32 %v1905, 0.0
    %v2020 = vmax.f32 %v1569, 0.0
    %v2021 = vmax.f32 %v1571, 0.0
    %v2022 = vmax.f32 %v1908, 0.0
    %v2023 = vmax.f32 %v1575, 0.0
    %v2024 = vmax.f32 %v1577, 0.0
    %v2025 = vmax.f32 %v1913, 0.0
    %v2026 = vmax.f32 %v1579, 0.0
    %v2027 = vmax.f32 %v1581, 0.0
    %v2028 = vmax.f32 %v1916, 0.0
    %v2029 = vmax.f32 %v1585, 0.0
    %v2030 = vmax.f32 %v1587, 0.0
    %v2031 = vmax.f32 %v1921, 0.0
    %v2032 = vmax.f32 %v1589, 0.0
    %v2033 = vmax.f32 %v1591, 0.0
    %v2034 = vmax.f32 %v1924, 0.0
    %v2035 = vmax.f32 %v1595, 0.0
    %v2036 = vmax.f32 %v1597, 0.0
    %v2037 = vmax.f32 %v1929, 0.0
    %v2038 = vmax.f32 %v1599, 0.0
    %v2039 = vmax.f32 %v1601, 0.0
    %v2040 = vmax.f32 %v1932, 0.0
    %v2041 = vmax.f32 %v1605, 0.0
    %v2042 = vmax.f32 %v1607, 0.0
    %v2043 = vmax.f32 %v1937, 0.0
    %v2044 = vmax.f32 %v1609, 0.0
    %v2045 = vmax.f32 %v1611, 0.0
    %v2046 = vmax.f32 %v1940, 0.0
    %v2047 = vmax.f32 %v1615, 0.0
    %v2048 = vmax.f32 %v1617, 0.0
    %v2049 = vmax.f32 %v1945, 0.0
    %v2050 = vmax.f32 %v1619, 0.0
    %v2051 = vmax.f32 %v1621, 0.0
    %v2052 = vmax.f32 %v1948, 0.0
    %v2053 = vmax.f32 %v1625, 0.0
    %v2054 = vmax.f32 %v1627, 0.0
    %v2055 = vmax.f32 %v1953, 0.0
    %v2056 = vmax.f32 %v1629, 0.0
    %v2057 = vmax.f32 %v1631, 0.0
    %v2058 = vmax.f32 %v1956, 0.0
    %v2059 = vmax.f32 %v1635, 0.0
    %v2060 = vmax.f32 %v1637, 0.0
    %v2061 = vmax.f32 %v1961, 0.0
    %v2062 = vmax.f32 %v1639, 0.0
    %v2063 = vmax.f32 %v1641, 0.0
    %v2064 = vmax.f32 %v1964, 0.0
    %v2065 = vmax.f32 %v1645, 0.0
    %v2066 = vmax.f32 %v1647, 0.0
    %v2067 = vmax.f32 %v1969, 0.0
    %v2068 = vmax.f32 %v1649, 0.0
    %v2069 = vmax.f32 %v1651, 0.0
    %v2070 = vmax.f32 %v1972, 0.0
    %v2071 = vpack.c.bf16 %v1978, %v1975
    %v2072 = vpack.c.bf16 %v1979, %v1976
    %v2073 = vpack.c.bf16 %v1980, %v1977
    %v2074 = vpack.c.bf16 %v1984, %v1981
    %v2075 = vpack.c.bf16 %v1985, %v1982
    %v2076 = vpack.c.bf16 %v1986, %v1983
    %v2077 = vpack.c.bf16 %v1990, %v1987
    %v2078 = vpack.c.bf16 %v1991, %v1988
    %v2079 = vpack.c.bf16 %v1992, %v1989
    %v2080 = vpack.c.bf16 %v1996, %v1993
    %v2081 = vpack.c.bf16 %v1997, %v1994
    %v2082 = vpack.c.bf16 %v1998, %v1995
    %v2083 = vpack.c.bf16 %v2002, %v1999
    %v2084 = vpack.c.bf16 %v2003, %v2000
    %v2085 = vpack.c.bf16 %v2004, %v2001
    %v2086 = vpack.c.bf16 %v2008, %v2005
    %v2087 = vpack.c.bf16 %v2009, %v2006
    %v2088 = vpack.c.bf16 %v2010, %v2007
    %v2089 = vpack.c.bf16 %v2014, %v2011
    %v2090 = vpack.c.bf16 %v2015, %v2012
    %v2091 = vpack.c.bf16 %v2016, %v2013
    %v2092 = vpack.c.bf16 %v2020, %v2017
    %v2093 = vpack.c.bf16 %v2021, %v2018
    %v2094 = vpack.c.bf16 %v2022, %v2019
    %v2095 = vpack.c.bf16 %v2026, %v2023
    %v2096 = vpack.c.bf16 %v2027, %v2024
    %v2097 = vpack.c.bf16 %v2028, %v2025
    %v2098 = vpack.c.bf16 %v2032, %v2029
    %v2099 = vpack.c.bf16 %v2033, %v2030
    %v2100 = vpack.c.bf16 %v2034, %v2031
    %v2101 = vpack.c.bf16 %v2038, %v2035
    %v2102 = vpack.c.bf16 %v2039, %v2036
    %v2103 = vpack.c.bf16 %v2040, %v2037
    %v2104 = vpack.c.bf16 %v2044, %v2041
    %v2105 = vpack.c.bf16 %v2045, %v2042
    %v2106 = vpack.c.bf16 %v2046, %v2043
    %v2107 = vpack.c.bf16 %v2050, %v2047
    %v2108 = vpack.c.bf16 %v2051, %v2048
    %v2109 = vpack.c.bf16 %v2052, %v2049
    %v2110 = vpack.c.bf16 %v2056, %v2053
    %v2111 = vpack.c.bf16 %v2057, %v2054
    %v2112 = vpack.c.bf16 %v2058, %v2055
    %v2113 = vpack.c.bf16 %v2062, %v2059
    %v2114 = vpack.c.bf16 %v2063, %v2060
    %v2115 = vpack.c.bf16 %v2064, %v2061
    %v2116 = vpack.c.bf16 %v2068, %v2065
    %v2117 = vpack.c.bf16 %v2069, %v2066
    %v2118 = vpack.c.bf16 %v2070, %v2067
    %v2119 = vld [vmem:[#allocation5] sm:$0xf]
    %v2120 = vld [vmem:[#allocation5 + $0x4] sm:$0xf]
    %v2121 = vld [vmem:[#allocation5 + $0x8] sm:$0xf]
    %v2122 = vld [vmem:[#allocation5 + $0xc] sm:$0xf]
    %v2123 = vld [vmem:[#allocation5 + $0x10] sm:$0xf]
    %v2124 = vld [vmem:[#allocation5 + $0x14] sm:$0xf]
    %v2125 = vld [vmem:[#allocation5 + $0x18] sm:$0xf]
    %v2126 = vld [vmem:[#allocation5 + $0x1c] sm:$0xf]
    %v2127 = vld [vmem:[#allocation5 + $0x20] sm:$0xf]
    %v2128 = vld [vmem:[#allocation5 + $0x24] sm:$0xf]
    %v2129 = vld [vmem:[#allocation5 + $0x28] sm:$0xf]
    %v2130 = vld [vmem:[#allocation5 + $0x2c] sm:$0xf]
    %v2131 = vld [vmem:[#allocation5 + $0x30] sm:$0xf]
    %v2132 = vld [vmem:[#allocation5 + $0x34] sm:$0xf]
    %v2133 = vld [vmem:[#allocation5 + $0x38] sm:$0xf]
    %v2134 = vld [vmem:[#allocation5 + $0x3c] sm:$0xf]
    %v2135 = vld [vmem:[#allocation5 + $0x40] sm:$0xf]
    %v2136 = vld [vmem:[#allocation5 + $0x44] sm:$0xf]
    %v2137 = vld [vmem:[#allocation5 + $0x48] sm:$0xf]
    %v2138 = vld [vmem:[#allocation5 + $0x4c] sm:$0xf]
    %v2139 = vld [vmem:[#allocation5 + $0x50] sm:$0xf]
    %v2140 = vld [vmem:[#allocation5 + $0x54] sm:$0xf]
    %v2141 = vld [vmem:[#allocation5 + $0x58] sm:$0xf]
    %v2142 = vld [vmem:[#allocation5 + $0x5c] sm:$0xf]
    %v2143 = vld [vmem:[#allocation5 + $0x60] sm:$0xf]
    %v2144 = vld [vmem:[#allocation5 + $0x64] sm:$0xf]
    %v2145 = vld [vmem:[#allocation5 + $0x68] sm:$0xf]
    %v2146 = vld [vmem:[#allocation5 + $0x6c] sm:$0xf]
    %v2147 = vld [vmem:[#allocation5 + $0x70] sm:$0xf]
    %v2148 = vld [vmem:[#allocation5 + $0x74] sm:$0xf]
    %v2149 = vld [vmem:[#allocation5 + $0x78] sm:$0xf]
    %v2150 = vld [vmem:[#allocation5 + $0x7c] sm:$0xf]
    %v2151 = vld [vmem:[#allocation5 + $0x80] sm:$0xf]
    %v2152 = vld [vmem:[#allocation5 + $0x84] sm:$0xf]
    %v2153 = vld [vmem:[#allocation5 + $0x88] sm:$0xf]
    %v2154 = vld [vmem:[#allocation5 + $0x8c] sm:$0xf]
    %v2155 = vld [vmem:[#allocation5 + $0x90] sm:$0xf]
    %v2156 = vld [vmem:[#allocation5 + $0x94] sm:$0xf]
    %v2157 = vld [vmem:[#allocation5 + $0x98] sm:$0xf]
    %v2158 = vld [vmem:[#allocation5 + $0x9c] sm:$0xf]
    %v2159 = vld [vmem:[#allocation5 + $0xa0] sm:$0xf]
    %v2160 = vld [vmem:[#allocation5 + $0xa4] sm:$0xf]
    %v2161 = vld [vmem:[#allocation5 + $0xa8] sm:$0xf]
    %v2162 = vld [vmem:[#allocation5 + $0xac] sm:$0xf]
    %v2163 = vld [vmem:[#allocation5 + $0xb0] sm:$0xf]
    %v2164 = vld [vmem:[#allocation5 + $0xb4] sm:$0xf]
    %v2165 = vld [vmem:[#allocation5 + $0xb8] sm:$0xf]
    %v2166 = vld [vmem:[#allocation5 + $0xbc] sm:$0xf]
    %v2168 = vlaneseq
    %v2169 = vshrl.u32 %v2168, 7
    %v2170 = vsub.s32 0, %v2169
    %v2171 = vrot.slane %v87, %v2170
    %v2221 = vunpack.c.l.b16 %v2119
    %v2222 = vunpack.c.l.b16 %v2120
    %v2223 = vunpack.c.l.b16 %v2121
    %v2224 = vunpack.c.l.b16 %v2122
    %v2225 = vunpack.c.l.b16 %v2123
    %v2226 = vunpack.c.l.b16 %v2124
    %v2227 = vunpack.c.l.b16 %v2125
    %v2228 = vunpack.c.l.b16 %v2126
    %v2229 = vunpack.c.l.b16 %v2127
    %v2230 = vunpack.c.l.b16 %v2128
    %v2231 = vunpack.c.l.b16 %v2129
    %v2232 = vunpack.c.l.b16 %v2130
    %v2233 = vunpack.c.l.b16 %v2131
    %v2234 = vunpack.c.l.b16 %v2132
    %v2235 = vunpack.c.l.b16 %v2133
    %v2236 = vunpack.c.l.b16 %v2134
    %v2237 = vunpack.c.l.b16 %v2135
    %v2238 = vunpack.c.l.b16 %v2136
    %v2239 = vunpack.c.l.b16 %v2137
    %v2240 = vunpack.c.l.b16 %v2138
    %v2241 = vunpack.c.l.b16 %v2139
    %v2242 = vunpack.c.l.b16 %v2140
    %v2243 = vunpack.c.l.b16 %v2141
    %v2244 = vunpack.c.l.b16 %v2142
    %v2245 = vunpack.c.l.b16 %v2143
    %v2246 = vunpack.c.l.b16 %v2144
    %v2247 = vunpack.c.l.b16 %v2145
    %v2248 = vunpack.c.l.b16 %v2146
    %v2249 = vunpack.c.l.b16 %v2147
    %v2250 = vunpack.c.l.b16 %v2148
    %v2251 = vunpack.c.l.b16 %v2149
    %v2252 = vunpack.c.l.b16 %v2150
    %v2253 = vunpack.c.l.b16 %v2151
    %v2254 = vunpack.c.l.b16 %v2152
    %v2255 = vunpack.c.l.b16 %v2153
    %v2256 = vunpack.c.l.b16 %v2154
    %v2257 = vunpack.c.l.b16 %v2155
    %v2258 = vunpack.c.l.b16 %v2156
    %v2259 = vunpack.c.l.b16 %v2157
    %v2260 = vunpack.c.l.b16 %v2158
    %v2261 = vunpack.c.l.b16 %v2159
    %v2262 = vunpack.c.l.b16 %v2160
    %v2263 = vunpack.c.l.b16 %v2161
    %v2264 = vunpack.c.l.b16 %v2162
    %v2265 = vunpack.c.l.b16 %v2163
    %v2266 = vunpack.c.l.b16 %v2164
    %v2267 = vunpack.c.l.b16 %v2165
    %v2268 = vunpack.c.l.b16 %v2166
    %v2269 = vpack.c.b16 %v2222, %v2221
    %v2270 = vpack.c.b16 %v2224, %v2223
    %v2271 = vpack.c.b16 %v2226, %v2225
    %v2272 = vpack.c.b16 %v2228, %v2227
    %v2273 = vpack.c.b16 %v2230, %v2229
    %v2274 = vpack.c.b16 %v2232, %v2231
    %v2275 = vpack.c.b16 %v2234, %v2233
    %v2276 = vpack.c.b16 %v2236, %v2235
    %v2277 = vpack.c.b16 %v2238, %v2237
    %v2278 = vpack.c.b16 %v2240, %v2239
    %v2279 = vpack.c.b16 %v2242, %v2241
    %v2280 = vpack.c.b16 %v2244, %v2243
    %v2281 = vpack.c.b16 %v2246, %v2245
    %v2282 = vpack.c.b16 %v2248, %v2247
    %v2283 = vpack.c.b16 %v2250, %v2249
    %v2284 = vpack.c.b16 %v2252, %v2251
    %v2285 = vpack.c.b16 %v2254, %v2253
    %v2286 = vpack.c.b16 %v2256, %v2255
    %v2287 = vpack.c.b16 %v2258, %v2257
    %v2288 = vpack.c.b16 %v2260, %v2259
    %v2289 = vpack.c.b16 %v2262, %v2261
    %v2290 = vpack.c.b16 %v2264, %v2263
    %v2291 = vpack.c.b16 %v2266, %v2265
    %v2292 = vpack.c.b16 %v2268, %v2267
    %2317 = vmatprep.subr.bf16.mxu0 0
    %2318 = vmatpush1.bf16.msra.mxu0 %v2276
    %2319 = vmatprep.subr.bf16.mxu0 0
    %2320 = vmatpush1.bf16.msra.mxu0 %v2275
    %2321 = vmatprep.subr.bf16.mxu0 0
    %2322 = vmatpush1.bf16.msra.mxu0 %v2274
    %2323 = vmatprep.subr.bf16.mxu0 0
    %2324 = vmatpush1.bf16.msra.mxu0 %v2273
    %2325 = vmatprep.subr.bf16.mxu0 0
    %2326 = vmatpush1.bf16.msra.mxu0 %v2272
    %2327 = vmatprep.subr.bf16.mxu0 0
    %2328 = vmatpush1.bf16.msra.mxu0 %v2271
    %2329 = vmatprep.subr.bf16.mxu0 0
    %2330 = vmatpush1.bf16.msra.mxu0 %v2270
    %2331 = vmatprep.subr.bf16.mxu0 0
    %2332 = vmatpush1.bf16.msra.mxu0 %v2269
    %2333 = vmatprep.subr.bf16.mxu0 0
    %2334 = vmatpush2.bf16.msra.mxu0 %v2284
    %2335 = vmatprep.subr.bf16.mxu0 0
    %2336 = vmatpush2.bf16.msra.mxu0 %v2283
    %2337 = vmatprep.subr.bf16.mxu0 0
    %2338 = vmatpush2.bf16.msra.mxu0 %v2282
    %2339 = vmatprep.subr.bf16.mxu0 0
    %2340 = vmatpush2.bf16.msra.mxu0 %v2281
    %2341 = vmatprep.subr.bf16.mxu0 0
    %2342 = vmatpush2.bf16.msra.mxu0 %v2280
    %2343 = vmatprep.subr.bf16.mxu0 0
    %2344 = vmatpush2.bf16.msra.mxu0 %v2279
    %2345 = vmatprep.subr.bf16.mxu0 0
    %2346 = vmatpush2.bf16.msra.mxu0 %v2278
    %2347 = vmatprep.subr.bf16.mxu0 0
    %2348 = vmatpush2.bf16.msra.mxu0 %v2277
    %2349 = vmatprep.mubr.bf16.mxu0 %v2072
    %2350 = vmatmul.mubr.bf16.gmra.mxu0 %v2071
    %v2351 = vpop.f32.mrf.mxu0
    %v2352 = vadd.f32 %v2171, %v2351
    %v2353 = vpop.f32.mrf.mxu0
    %v2354 = vpop.f32.mrf.mxu0
    %v2355 = vadd.f32 %v2171, %v2354
    %v2356 = vpop.f32.mrf.mxu0
    %2357 = vmatprep.mubr.bf16.mxu0 %v2075
    %2358 = vmatmul.mubr.bf16.gmra.mxu0 %v2074
    %v2359 = vpop.f32.mrf.mxu0
    %v2360 = vadd.f32 %v2171, %v2359
    %v2361 = vpop.f32.mrf.mxu0
    %v2362 = vpop.f32.mrf.mxu0
    %v2363 = vadd.f32 %v2171, %v2362
    %v2364 = vpop.f32.mrf.mxu0
    %2365 = vmatprep.mubr.bf16.mxu0 %v2078
    %2366 = vmatmul.mubr.bf16.gmra.mxu0 %v2077
    %v2367 = vpop.f32.mrf.mxu0
    %v2368 = vadd.f32 %v2171, %v2367
    %v2369 = vpop.f32.mrf.mxu0
    %v2370 = vpop.f32.mrf.mxu0
    %v2371 = vadd.f32 %v2171, %v2370
    %v2372 = vpop.f32.mrf.mxu0
    %2373 = vmatprep.mubr.bf16.mxu0 %v2081
    %2374 = vmatmul.mubr.bf16.gmra.mxu0 %v2080
    %v2375 = vpop.f32.mrf.mxu0
    %v2376 = vadd.f32 %v2171, %v2375
    %v2377 = vpop.f32.mrf.mxu0
    %v2378 = vpop.f32.mrf.mxu0
    %v2379 = vadd.f32 %v2171, %v2378
    %v2380 = vpop.f32.mrf.mxu0
    %2381 = vmatprep.mubr.bf16.mxu0 %v2084
    %2382 = vmatmul.mubr.bf16.gmra.mxu0 %v2083
    %v2383 = vpop.f32.mrf.mxu0
    %v2384 = vadd.f32 %v2171, %v2383
    %v2385 = vpop.f32.mrf.mxu0
    %v2386 = vpop.f32.mrf.mxu0
    %v2387 = vadd.f32 %v2171, %v2386
    %v2388 = vpop.f32.mrf.mxu0
    %2389 = vmatprep.mubr.bf16.mxu0 %v2087
    %2390 = vmatmul.mubr.bf16.gmra.mxu0 %v2086
    %v2391 = vpop.f32.mrf.mxu0
    %v2392 = vadd.f32 %v2171, %v2391
    %v2393 = vpop.f32.mrf.mxu0
    %v2394 = vpop.f32.mrf.mxu0
    %v2395 = vadd.f32 %v2171, %v2394
    %v2396 = vpop.f32.mrf.mxu0
    %2397 = vmatprep.mubr.bf16.mxu0 %v2090
    %2398 = vmatmul.mubr.bf16.gmra.mxu0 %v2089
    %v2399 = vpop.f32.mrf.mxu0
    %v2400 = vadd.f32 %v2171, %v2399
    %v2401 = vpop.f32.mrf.mxu0
    %v2402 = vpop.f32.mrf.mxu0
    %v2403 = vadd.f32 %v2171, %v2402
    %v2404 = vpop.f32.mrf.mxu0
    %2405 = vmatprep.mubr.bf16.mxu0 %v2093
    %2406 = vmatmul.mubr.bf16.gmra.mxu0 %v2092
    %v2407 = vpop.f32.mrf.mxu0
    %v2408 = vadd.f32 %v2171, %v2407
    %v2409 = vpop.f32.mrf.mxu0
    %v2410 = vpop.f32.mrf.mxu0
    %v2411 = vadd.f32 %v2171, %v2410
    %v2412 = vpop.f32.mrf.mxu0
    %2413 = vmatprep.mubr.bf16.mxu0 %v2096
    %2414 = vmatmul.mubr.bf16.gmra.mxu0 %v2095
    %v2415 = vpop.f32.mrf.mxu0
    %v2416 = vadd.f32 %v2171, %v2415
    %v2417 = vpop.f32.mrf.mxu0
    %v2418 = vpop.f32.mrf.mxu0
    %v2419 = vadd.f32 %v2171, %v2418
    %v2420 = vpop.f32.mrf.mxu0
    %2421 = vmatprep.mubr.bf16.mxu0 %v2099
    %2422 = vmatmul.mubr.bf16.gmra.mxu0 %v2098
    %v2423 = vpop.f32.mrf.mxu0
    %v2424 = vadd.f32 %v2171, %v2423
    %v2425 = vpop.f32.mrf.mxu0
    %v2426 = vpop.f32.mrf.mxu0
    %v2427 = vadd.f32 %v2171, %v2426
    %v2428 = vpop.f32.mrf.mxu0
    %2429 = vmatprep.mubr.bf16.mxu0 %v2102
    %2430 = vmatmul.mubr.bf16.gmra.mxu0 %v2101
    %v2431 = vpop.f32.mrf.mxu0
    %v2432 = vadd.f32 %v2171, %v2431
    %v2433 = vpop.f32.mrf.mxu0
    %v2434 = vpop.f32.mrf.mxu0
    %v2435 = vadd.f32 %v2171, %v2434
    %v2436 = vpop.f32.mrf.mxu0
    %2437 = vmatprep.mubr.bf16.mxu0 %v2105
    %2438 = vmatmul.mubr.bf16.gmra.mxu0 %v2104
    %v2439 = vpop.f32.mrf.mxu0
    %v2440 = vadd.f32 %v2171, %v2439
    %v2441 = vpop.f32.mrf.mxu0
    %v2442 = vpop.f32.mrf.mxu0
    %v2443 = vadd.f32 %v2171, %v2442
    %v2444 = vpop.f32.mrf.mxu0
    %2445 = vmatprep.mubr.bf16.mxu0 %v2108
    %2446 = vmatmul.mubr.bf16.gmra.mxu0 %v2107
    %v2447 = vpop.f32.mrf.mxu0
    %v2448 = vadd.f32 %v2171, %v2447
    %v2449 = vpop.f32.mrf.mxu0
    %v2450 = vpop.f32.mrf.mxu0
    %v2451 = vadd.f32 %v2171, %v2450
    %v2452 = vpop.f32.mrf.mxu0
    %2453 = vmatprep.mubr.bf16.mxu0 %v2111
    %2454 = vmatmul.mubr.bf16.gmra.mxu0 %v2110
    %v2455 = vpop.f32.mrf.mxu0
    %v2456 = vadd.f32 %v2171, %v2455
    %v2457 = vpop.f32.mrf.mxu0
    %v2458 = vpop.f32.mrf.mxu0
    %v2459 = vadd.f32 %v2171, %v2458
    %v2460 = vpop.f32.mrf.mxu0
    %2461 = vmatprep.mubr.bf16.mxu0 %v2114
    %2462 = vmatmul.mubr.bf16.gmra.mxu0 %v2113
    %v2463 = vpop.f32.mrf.mxu0
    %v2464 = vadd.f32 %v2171, %v2463
    %v2465 = vpop.f32.mrf.mxu0
    %v2466 = vpop.f32.mrf.mxu0
    %v2467 = vadd.f32 %v2171, %v2466
    %v2468 = vpop.f32.mrf.mxu0
    %2469 = vmatprep.mubr.bf16.mxu0 %v2117
    %2470 = vmatmul.mubr.bf16.gmra.mxu0 %v2116
    %v2471 = vpop.f32.mrf.mxu0
    %v2472 = vadd.f32 %v2171, %v2471
    %v2473 = vpop.f32.mrf.mxu0
    %v2474 = vpop.f32.mrf.mxu0
    %v2475 = vadd.f32 %v2171, %v2474
    %v2476 = vpop.f32.mrf.mxu0
    %2477 = vdwg.mxu0
    %2478 = vmatprep.subr.bf16.mxu0 0
    %2479 = vmatpush1.bf16.msra.mxu0 %v2292
    %2480 = vmatprep.subr.bf16.mxu0 0
    %2481 = vmatpush1.bf16.msra.mxu0 %v2291
    %2482 = vmatprep.subr.bf16.mxu0 0
    %2483 = vmatpush1.bf16.msra.mxu0 %v2290
    %2484 = vmatprep.subr.bf16.mxu0 0
    %2485 = vmatpush1.bf16.msra.mxu0 %v2289
    %2486 = vmatprep.subr.bf16.mxu0 0
    %2487 = vmatpush1.bf16.msra.mxu0 %v2288
    %2488 = vmatprep.subr.bf16.mxu0 0
    %2489 = vmatpush1.bf16.msra.mxu0 %v2287
    %2490 = vmatprep.subr.bf16.mxu0 0
    %2491 = vmatpush1.bf16.msra.mxu0 %v2286
    %2492 = vmatprep.subr.bf16.mxu0 0
    %2493 = vmatpush1.bf16.msra.mxu0 %v2285
    %2494 = vmatprep.subr.bf16.mxu0 0
    %2495 = vmatpush2.bf16.msra.mxu0 0
    %2496 = vmatprep.subr.bf16.mxu0 0
    %2497 = vmatpush2.bf16.msra.mxu0 0
    %2498 = vmatprep.subr.bf16.mxu0 0
    %2499 = vmatpush2.bf16.msra.mxu0 0
    %2500 = vmatprep.subr.bf16.mxu0 0
    %2501 = vmatpush2.bf16.msra.mxu0 0
    %2502 = vmatprep.subr.bf16.mxu0 0
    %2503 = vmatpush2.bf16.msra.mxu0 0
    %2504 = vmatprep.subr.bf16.mxu0 0
    %2505 = vmatpush2.bf16.msra.mxu0 0
    %2506 = vmatprep.subr.bf16.mxu0 0
    %2507 = vmatpush2.bf16.msra.mxu0 0
    %2508 = vmatprep.subr.bf16.mxu0 0
    %2509 = vmatpush2.bf16.msra.mxu0 0
    %2510 = vmatprep.mubr.bf16.mxu0 0
    %2511 = vmatmul.mubr.bf16.gmra.mxu0 %v2073
    %v2512 = vpop.f32.mrf.mxu0
    %v2513 = vadd.f32 %v2352, %v2512
    %v2514 = vpop.f32.mrf.mxu0
    %v2515 = vpop.f32.mrf.mxu0
    %v2516 = vadd.f32 %v2355, %v2515
    %v2517 = vpop.f32.mrf.mxu0
    %2518 = vmatprep.mubr.bf16.mxu0 0
    %2519 = vmatmul.mubr.bf16.gmra.mxu0 %v2076
    %v2520 = vpop.f32.mrf.mxu0
    %v2521 = vadd.f32 %v2360, %v2520
    %v2522 = vpop.f32.mrf.mxu0
    %v2523 = vpop.f32.mrf.mxu0
    %v2524 = vadd.f32 %v2363, %v2523
    %v2525 = vpop.f32.mrf.mxu0
    %2526 = vmatprep.mubr.bf16.mxu0 0
    %2527 = vmatmul.mubr.bf16.gmra.mxu0 %v2079
    %v2528 = vpop.f32.mrf.mxu0
    %v2529 = vadd.f32 %v2368, %v2528
    %v2530 = vpop.f32.mrf.mxu0
    %v2531 = vpop.f32.mrf.mxu0
    %v2532 = vadd.f32 %v2371, %v2531
    %v2533 = vpop.f32.mrf.mxu0
    %2534 = vmatprep.mubr.bf16.mxu0 0
    %2535 = vmatmul.mubr.bf16.gmra.mxu0 %v2082
    %v2536 = vpop.f32.mrf.mxu0
    %v2537 = vadd.f32 %v2376, %v2536
    %v2538 = vpop.f32.mrf.mxu0
    %v2539 = vpop.f32.mrf.mxu0
    %v2540 = vadd.f32 %v2379, %v2539
    %v2541 = vpop.f32.mrf.mxu0
    %2542 = vmatprep.mubr.bf16.mxu0 0
    %2543 = vmatmul.mubr.bf16.gmra.mxu0 %v2085
    %v2544 = vpop.f32.mrf.mxu0
    %v2545 = vadd.f32 %v2384, %v2544
    %v2546 = vpop.f32.mrf.mxu0
    %v2547 = vpop.f32.mrf.mxu0
    %v2548 = vadd.f32 %v2387, %v2547
    %v2549 = vpop.f32.mrf.mxu0
    %2550 = vmatprep.mubr.bf16.mxu0 0
    %2551 = vmatmul.mubr.bf16.gmra.mxu0 %v2088
    %v2552 = vpop.f32.mrf.mxu0
    %v2553 = vadd.f32 %v2392, %v2552
    %v2554 = vpop.f32.mrf.mxu0
    %v2555 = vpop.f32.mrf.mxu0
    %v2556 = vadd.f32 %v2395, %v2555
    %v2557 = vpop.f32.mrf.mxu0
    %2558 = vmatprep.mubr.bf16.mxu0 0
    %2559 = vmatmul.mubr.bf16.gmra.mxu0 %v2091
    %v2560 = vpop.f32.mrf.mxu0
    %v2561 = vadd.f32 %v2400, %v2560
    %v2562 = vpop.f32.mrf.mxu0
    %v2563 = vpop.f32.mrf.mxu0
    %v2564 = vadd.f32 %v2403, %v2563
    %v2565 = vpop.f32.mrf.mxu0
    %2566 = vmatprep.mubr.bf16.mxu0 0
    %2567 = vmatmul.mubr.bf16.gmra.mxu0 %v2094
    %v2568 = vpop.f32.mrf.mxu0
    %v2569 = vadd.f32 %v2408, %v2568
    %v2570 = vpop.f32.mrf.mxu0
    %v2571 = vpop.f32.mrf.mxu0
    %v2572 = vadd.f32 %v2411, %v2571
    %v2573 = vpop.f32.mrf.mxu0
    %2574 = vmatprep.mubr.bf16.mxu0 0
    %2575 = vmatmul.mubr.bf16.gmra.mxu0 %v2097
    %v2576 = vpop.f32.mrf.mxu0
    %v2577 = vadd.f32 %v2416, %v2576
    %v2578 = vpop.f32.mrf.mxu0
    %v2579 = vpop.f32.mrf.mxu0
    %v2580 = vadd.f32 %v2419, %v2579
    %v2581 = vpop.f32.mrf.mxu0
    %2582 = vmatprep.mubr.bf16.mxu0 0
    %2583 = vmatmul.mubr.bf16.gmra.mxu0 %v2100
    %v2584 = vpop.f32.mrf.mxu0
    %v2585 = vadd.f32 %v2424, %v2584
    %v2586 = vpop.f32.mrf.mxu0
    %v2587 = vpop.f32.mrf.mxu0
    %v2588 = vadd.f32 %v2427, %v2587
    %v2589 = vpop.f32.mrf.mxu0
    %2590 = vmatprep.mubr.bf16.mxu0 0
    %2591 = vmatmul.mubr.bf16.gmra.mxu0 %v2103
    %v2592 = vpop.f32.mrf.mxu0
    %v2593 = vadd.f32 %v2432, %v2592
    %v2594 = vpop.f32.mrf.mxu0
    %v2595 = vpop.f32.mrf.mxu0
    %v2596 = vadd.f32 %v2435, %v2595
    %v2597 = vpop.f32.mrf.mxu0
    %2598 = vmatprep.mubr.bf16.mxu0 0
    %2599 = vmatmul.mubr.bf16.gmra.mxu0 %v2106
    %v2600 = vpop.f32.mrf.mxu0
    %v2601 = vadd.f32 %v2440, %v2600
    %v2602 = vpop.f32.mrf.mxu0
    %v2603 = vpop.f32.mrf.mxu0
    %v2604 = vadd.f32 %v2443, %v2603
    %v2605 = vpop.f32.mrf.mxu0
    %2606 = vmatprep.mubr.bf16.mxu0 0
    %2607 = vmatmul.mubr.bf16.gmra.mxu0 %v2109
    %v2608 = vpop.f32.mrf.mxu0
    %v2609 = vadd.f32 %v2448, %v2608
    %v2610 = vpop.f32.mrf.mxu0
    %v2611 = vpop.f32.mrf.mxu0
    %v2612 = vadd.f32 %v2451, %v2611
    %v2613 = vpop.f32.mrf.mxu0
    %2614 = vmatprep.mubr.bf16.mxu0 0
    %2615 = vmatmul.mubr.bf16.gmra.mxu0 %v2112
    %v2616 = vpop.f32.mrf.mxu0
    %v2617 = vadd.f32 %v2456, %v2616
    %v2618 = vpop.f32.mrf.mxu0
    %v2619 = vpop.f32.mrf.mxu0
    %v2620 = vadd.f32 %v2459, %v2619
    %v2621 = vpop.f32.mrf.mxu0
    %2622 = vmatprep.mubr.bf16.mxu0 0
    %2623 = vmatmul.mubr.bf16.gmra.mxu0 %v2115
    %v2624 = vpop.f32.mrf.mxu0
    %v2625 = vadd.f32 %v2464, %v2624
    %v2626 = vpop.f32.mrf.mxu0
    %v2627 = vpop.f32.mrf.mxu0
    %v2628 = vadd.f32 %v2467, %v2627
    %v2629 = vpop.f32.mrf.mxu0
    %2630 = vmatprep.mubr.bf16.mxu0 0
    %2631 = vmatmul.mubr.bf16.gmra.mxu0 %v2118
    %v2632 = vpop.f32.mrf.mxu0
    %v2633 = vadd.f32 %v2472, %v2632
    %v2634 = vpop.f32.mrf.mxu0
    %v2635 = vpop.f32.mrf.mxu0
    %v2636 = vadd.f32 %v2475, %v2635
    %v2637 = vpop.f32.mrf.mxu0
    %2638 = vdwg.mxu0
    %v2639 = vmax.f32 %v2513, 0.0
    %v2640 = vmax.f32 %v2516, 0.0
    %v2641 = vmax.f32 %v2521, 0.0
    %v2642 = vmax.f32 %v2524, 0.0
    %v2643 = vmax.f32 %v2529, 0.0
    %v2644 = vmax.f32 %v2532, 0.0
    %v2645 = vmax.f32 %v2537, 0.0
    %v2646 = vmax.f32 %v2540, 0.0
    %v2647 = vmax.f32 %v2545, 0.0
    %v2648 = vmax.f32 %v2548, 0.0
    %v2649 = vmax.f32 %v2553, 0.0
    %v2650 = vmax.f32 %v2556, 0.0
    %v2651 = vmax.f32 %v2561, 0.0
    %v2652 = vmax.f32 %v2564, 0.0
    %v2653 = vmax.f32 %v2569, 0.0
    %v2654 = vmax.f32 %v2572, 0.0
    %v2655 = vmax.f32 %v2577, 0.0
    %v2656 = vmax.f32 %v2580, 0.0
    %v2657 = vmax.f32 %v2585, 0.0
    %v2658 = vmax.f32 %v2588, 0.0
    %v2659 = vmax.f32 %v2593, 0.0
    %v2660 = vmax.f32 %v2596, 0.0
    %v2661 = vmax.f32 %v2601, 0.0
    %v2662 = vmax.f32 %v2604, 0.0
    %v2663 = vmax.f32 %v2609, 0.0
    %v2664 = vmax.f32 %v2612, 0.0
    %v2665 = vmax.f32 %v2617, 0.0
    %v2666 = vmax.f32 %v2620, 0.0
    %v2667 = vmax.f32 %v2625, 0.0
    %v2668 = vmax.f32 %v2628, 0.0
    %v2669 = vmax.f32 %v2633, 0.0
    %v2670 = vmax.f32 %v2636, 0.0
    %v2671 = vpack.c.bf16 %v2640, %v2639
    %v2672 = vpack.c.bf16 %v2642, %v2641
    %v2673 = vpack.c.bf16 %v2644, %v2643
    %v2674 = vpack.c.bf16 %v2646, %v2645
    %v2675 = vpack.c.bf16 %v2648, %v2647
    %v2676 = vpack.c.bf16 %v2650, %v2649
    %v2677 = vpack.c.bf16 %v2652, %v2651
    %v2678 = vpack.c.bf16 %v2654, %v2653
    %v2679 = vpack.c.bf16 %v2656, %v2655
    %v2680 = vpack.c.bf16 %v2658, %v2657
    %v2681 = vpack.c.bf16 %v2660, %v2659
    %v2682 = vpack.c.bf16 %v2662, %v2661
    %v2683 = vpack.c.bf16 %v2664, %v2663
    %v2684 = vpack.c.bf16 %v2666, %v2665
    %v2685 = vpack.c.bf16 %v2668, %v2667
    %v2686 = vpack.c.bf16 %v2670, %v2669
    %v2687 = vld [vmem:[%s4] sm:$0xf]
    %v2688 = vld [vmem:[%s4 + $0x4] sm:$0xf]
    %v2689 = vld [vmem:[%s4 + $0x8] sm:$0xf]
    %v2690 = vld [vmem:[%s4 + $0xc] sm:$0xf]
    %v2691 = vld [vmem:[%s4 + $0x10] sm:$0xf]
    %v2692 = vld [vmem:[%s4 + $0x14] sm:$0xf]
    %v2693 = vld [vmem:[%s4 + $0x18] sm:$0xf]
    %v2694 = vld [vmem:[%s4 + $0x1c] sm:$0xf]
    %v2695 = vld [vmem:[%s4 + $0x20] sm:$0xf]
    %v2696 = vld [vmem:[%s4 + $0x24] sm:$0xf]
    %v2697 = vld [vmem:[%s4 + $0x28] sm:$0xf]
    %v2698 = vld [vmem:[%s4 + $0x2c] sm:$0xf]
    %v2699 = vld [vmem:[%s4 + $0x30] sm:$0xf]
    %v2700 = vld [vmem:[%s4 + $0x34] sm:$0xf]
    %v2701 = vld [vmem:[%s4 + $0x38] sm:$0xf]
    %v2702 = vld [vmem:[%s4 + $0x3c] sm:$0xf]
    %v2719 = vunpack.c.l.b16 %v2687
    %v2720 = vunpack.c.l.b16 %v2688
    %v2721 = vunpack.c.l.b16 %v2689
    %v2722 = vunpack.c.l.b16 %v2690
    %v2723 = vunpack.c.l.b16 %v2691
    %v2724 = vunpack.c.l.b16 %v2692
    %v2725 = vunpack.c.l.b16 %v2693
    %v2726 = vunpack.c.l.b16 %v2694
    %v2727 = vunpack.c.l.b16 %v2695
    %v2728 = vunpack.c.l.b16 %v2696
    %v2729 = vunpack.c.l.b16 %v2697
    %v2730 = vunpack.c.l.b16 %v2698
    %v2731 = vunpack.c.l.b16 %v2699
    %v2732 = vunpack.c.l.b16 %v2700
    %v2733 = vunpack.c.l.b16 %v2701
    %v2734 = vunpack.c.l.b16 %v2702
    %v2735 = vpack.c.b16 %v2720, %v2719
    %v2736 = vpack.c.b16 %v2722, %v2721
    %v2737 = vpack.c.b16 %v2724, %v2723
    %v2738 = vpack.c.b16 %v2726, %v2725
    %v2739 = vpack.c.b16 %v2728, %v2727
    %v2740 = vpack.c.b16 %v2730, %v2729
    %v2741 = vpack.c.b16 %v2732, %v2731
    %v2742 = vpack.c.b16 %v2734, %v2733
    %2751 = vmatprep.subr.bf16.mxu0 0
    %2752 = vmatpush1.bf16.msra.mxu0 %v2742
    %2753 = vmatprep.subr.bf16.mxu0 0
    %2754 = vmatpush1.bf16.msra.mxu0 %v2741
    %2755 = vmatprep.subr.bf16.mxu0 0
    %2756 = vmatpush1.bf16.msra.mxu0 %v2740
    %2757 = vmatprep.subr.bf16.mxu0 0
    %2758 = vmatpush1.bf16.msra.mxu0 %v2739
    %2759 = vmatprep.subr.bf16.mxu0 0
    %2760 = vmatpush1.bf16.msra.mxu0 %v2738
    %2761 = vmatprep.subr.bf16.mxu0 0
    %2762 = vmatpush1.bf16.msra.mxu0 %v2737
    %2763 = vmatprep.subr.bf16.mxu0 0
    %2764 = vmatpush1.bf16.msra.mxu0 %v2736
    %2765 = vmatprep.subr.bf16.mxu0 0
    %2766 = vmatpush1.bf16.msra.mxu0 %v2735
    %2767 = vmatprep.subr.bf16.mxu0 0
    %2768 = vmatpush2.bf16.msra.mxu0 0
    %2769 = vmatprep.subr.bf16.mxu0 0
    %2770 = vmatpush2.bf16.msra.mxu0 0
    %2771 = vmatprep.subr.bf16.mxu0 0
    %2772 = vmatpush2.bf16.msra.mxu0 0
    %2773 = vmatprep.subr.bf16.mxu0 0
    %2774 = vmatpush2.bf16.msra.mxu0 0
    %2775 = vmatprep.subr.bf16.mxu0 0
    %2776 = vmatpush2.bf16.msra.mxu0 0
    %2777 = vmatprep.subr.bf16.mxu0 0
    %2778 = vmatpush2.bf16.msra.mxu0 0
    %2779 = vmatprep.subr.bf16.mxu0 0
    %2780 = vmatpush2.bf16.msra.mxu0 0
    %2781 = vmatprep.subr.bf16.mxu0 0
    %2782 = vmatpush2.bf16.msra.mxu0 0
    %2783 = vmatprep.mubr.bf16.mxu0 0
    %2784 = vmatmul.mubr.bf16.gmra.mxu0 %v2671
    %v2785 = vpop.f32.mrf.mxu0
    %v2786 = vadd.f32 0.0, %v2785
    %v2787 = vpop.f32.mrf.mxu0
    %v2788 = vpop.f32.mrf.mxu0
    %v2789 = vadd.f32 0.0, %v2788
    %v2790 = vpop.f32.mrf.mxu0
    %2791 = vmatprep.mubr.bf16.mxu0 0
    %2792 = vmatmul.mubr.bf16.gmra.mxu0 %v2672
    %v2793 = vpop.f32.mrf.mxu0
    %v2794 = vadd.f32 0.0, %v2793
    %v2795 = vpop.f32.mrf.mxu0
    %v2796 = vpop.f32.mrf.mxu0
    %v2797 = vadd.f32 0.0, %v2796
    %v2798 = vpop.f32.mrf.mxu0
    %2799 = vmatprep.mubr.bf16.mxu0 0
    %2800 = vmatmul.mubr.bf16.gmra.mxu0 %v2673
    %v2801 = vpop.f32.mrf.mxu0
    %v2802 = vadd.f32 0.0, %v2801
    %v2803 = vpop.f32.mrf.mxu0
    %v2804 = vpop.f32.mrf.mxu0
    %v2805 = vadd.f32 0.0, %v2804
    %v2806 = vpop.f32.mrf.mxu0
    %2807 = vmatprep.mubr.bf16.mxu0 0
    %2808 = vmatmul.mubr.bf16.gmra.mxu0 %v2674
    %v2809 = vpop.f32.mrf.mxu0
    %v2810 = vadd.f32 0.0, %v2809
    %v2811 = vpop.f32.mrf.mxu0
    %v2812 = vpop.f32.mrf.mxu0
    %v2813 = vadd.f32 0.0, %v2812
    %v2814 = vpop.f32.mrf.mxu0
    %2815 = vmatprep.mubr.bf16.mxu0 0
    %2816 = vmatmul.mubr.bf16.gmra.mxu0 %v2675
    %v2817 = vpop.f32.mrf.mxu0
    %v2818 = vadd.f32 0.0, %v2817
    %v2819 = vpop.f32.mrf.mxu0
    %v2820 = vpop.f32.mrf.mxu0
    %v2821 = vadd.f32 0.0, %v2820
    %v2822 = vpop.f32.mrf.mxu0
    %2823 = vmatprep.mubr.bf16.mxu0 0
    %2824 = vmatmul.mubr.bf16.gmra.mxu0 %v2676
    %v2825 = vpop.f32.mrf.mxu0
    %v2826 = vadd.f32 0.0, %v2825
    %v2827 = vpop.f32.mrf.mxu0
    %v2828 = vpop.f32.mrf.mxu0
    %v2829 = vadd.f32 0.0, %v2828
    %v2830 = vpop.f32.mrf.mxu0
    %2831 = vmatprep.mubr.bf16.mxu0 0
    %2832 = vmatmul.mubr.bf16.gmra.mxu0 %v2677
    %v2833 = vpop.f32.mrf.mxu0
    %v2834 = vadd.f32 0.0, %v2833
    %v2835 = vpop.f32.mrf.mxu0
    %v2836 = vpop.f32.mrf.mxu0
    %v2837 = vadd.f32 0.0, %v2836
    %v2838 = vpop.f32.mrf.mxu0
    %2839 = vmatprep.mubr.bf16.mxu0 0
    %2840 = vmatmul.mubr.bf16.gmra.mxu0 %v2678
    %v2841 = vpop.f32.mrf.mxu0
    %v2842 = vadd.f32 0.0, %v2841
    %v2843 = vpop.f32.mrf.mxu0
    %v2844 = vpop.f32.mrf.mxu0
    %v2845 = vadd.f32 0.0, %v2844
    %v2846 = vpop.f32.mrf.mxu0
    %2847 = vmatprep.mubr.bf16.mxu0 0
    %2848 = vmatmul.mubr.bf16.gmra.mxu0 %v2679
    %v2849 = vpop.f32.mrf.mxu0
    %v2850 = vadd.f32 0.0, %v2849
    %v2851 = vpop.f32.mrf.mxu0
    %v2852 = vpop.f32.mrf.mxu0
    %v2853 = vadd.f32 0.0, %v2852
    %v2854 = vpop.f32.mrf.mxu0
    %2855 = vmatprep.mubr.bf16.mxu0 0
    %2856 = vmatmul.mubr.bf16.gmra.mxu0 %v2680
    %v2857 = vpop.f32.mrf.mxu0
    %v2858 = vadd.f32 0.0, %v2857
    %v2859 = vpop.f32.mrf.mxu0
    %v2860 = vpop.f32.mrf.mxu0
    %v2861 = vadd.f32 0.0, %v2860
    %v2862 = vpop.f32.mrf.mxu0
    %2863 = vmatprep.mubr.bf16.mxu0 0
    %2864 = vmatmul.mubr.bf16.gmra.mxu0 %v2681
    %v2865 = vpop.f32.mrf.mxu0
    %v2866 = vadd.f32 0.0, %v2865
    %v2867 = vpop.f32.mrf.mxu0
    %v2868 = vpop.f32.mrf.mxu0
    %v2869 = vadd.f32 0.0, %v2868
    %v2870 = vpop.f32.mrf.mxu0
    %2871 = vmatprep.mubr.bf16.mxu0 0
    %2872 = vmatmul.mubr.bf16.gmra.mxu0 %v2682
    %v2873 = vpop.f32.mrf.mxu0
    %v2874 = vadd.f32 0.0, %v2873
    %v2875 = vpop.f32.mrf.mxu0
    %v2876 = vpop.f32.mrf.mxu0
    %v2877 = vadd.f32 0.0, %v2876
    %v2878 = vpop.f32.mrf.mxu0
    %2879 = vmatprep.mubr.bf16.mxu0 0
    %2880 = vmatmul.mubr.bf16.gmra.mxu0 %v2683
    %v2881 = vpop.f32.mrf.mxu0
    %v2882 = vadd.f32 0.0, %v2881
    %v2883 = vpop.f32.mrf.mxu0
    %v2884 = vpop.f32.mrf.mxu0
    %v2885 = vadd.f32 0.0, %v2884
    %v2886 = vpop.f32.mrf.mxu0
    %2887 = vmatprep.mubr.bf16.mxu0 0
    %2888 = vmatmul.mubr.bf16.gmra.mxu0 %v2684
    %v2889 = vpop.f32.mrf.mxu0
    %v2890 = vadd.f32 0.0, %v2889
    %v2891 = vpop.f32.mrf.mxu0
    %v2892 = vpop.f32.mrf.mxu0
    %v2893 = vadd.f32 0.0, %v2892
    %v2894 = vpop.f32.mrf.mxu0
    %2895 = vmatprep.mubr.bf16.mxu0 0
    %2896 = vmatmul.mubr.bf16.gmra.mxu0 %v2685
    %v2897 = vpop.f32.mrf.mxu0
    %v2898 = vadd.f32 0.0, %v2897
    %v2899 = vpop.f32.mrf.mxu0
    %v2900 = vpop.f32.mrf.mxu0
    %v2901 = vadd.f32 0.0, %v2900
    %v2902 = vpop.f32.mrf.mxu0
    %2903 = vmatprep.mubr.bf16.mxu0 0
    %2904 = vmatmul.mubr.bf16.gmra.mxu0 %v2686
    %v2905 = vpop.f32.mrf.mxu0
    %v2906 = vadd.f32 0.0, %v2905
    %v2907 = vpop.f32.mrf.mxu0
    %v2908 = vpop.f32.mrf.mxu0
    %v2909 = vadd.f32 0.0, %v2908
    %v2910 = vpop.f32.mrf.mxu0
    %2911 = vdwg.mxu0
    %2912 = vst [vmem:[#allocation7] sm:$0xff] %v2786
    %2913 = vst [vmem:[#allocation7 + $0x8] sm:$0xff] %v2789
    %2914 = vst [vmem:[#allocation7 + $0x10] sm:$0xff] %v2794
    %2915 = vst [vmem:[#allocation7 + $0x18] sm:$0xff] %v2797
    %2916 = vst [vmem:[#allocation7 + $0x20] sm:$0xff] %v2802
    %2917 = vst [vmem:[#allocation7 + $0x28] sm:$0xff] %v2805
    %2918 = vst [vmem:[#allocation7 + $0x30] sm:$0xff] %v2810
    %2919 = vst [vmem:[#allocation7 + $0x38] sm:$0xff] %v2813
    %2920 = vst [vmem:[#allocation7 + $0x40] sm:$0xff] %v2818
    %2921 = vst [vmem:[#allocation7 + $0x48] sm:$0xff] %v2821
    %2922 = vst [vmem:[#allocation7 + $0x50] sm:$0xff] %v2826
    %2923 = vst [vmem:[#allocation7 + $0x58] sm:$0xff] %v2829
    %2924 = vst [vmem:[#allocation7 + $0x60] sm:$0xff] %v2834
    %2925 = vst [vmem:[#allocation7 + $0x68] sm:$0xff] %v2837
    %2926 = vst [vmem:[#allocation7 + $0x70] sm:$0xff] %v2842
    %2927 = vst [vmem:[#allocation7 + $0x78] sm:$0xff] %v2845
    %2928 = vst [vmem:[#allocation7 + $0x80] sm:$0xff] %v2850
    %2929 = vst [vmem:[#allocation7 + $0x88] sm:$0xff] %v2853
    %2930 = vst [vmem:[#allocation7 + $0x90] sm:$0xff] %v2858
    %2931 = vst [vmem:[#allocation7 + $0x98] sm:$0xff] %v2861
    %2932 = vst [vmem:[#allocation7 + $0xa0] sm:$0xff] %v2866
    %2933 = vst [vmem:[#allocation7 + $0xa8] sm:$0xff] %v2869
    %2934 = vst [vmem:[#allocation7 + $0xb0] sm:$0xff] %v2874
    %2935 = vst [vmem:[#allocation7 + $0xb8] sm:$0xff] %v2877
    %2936 = vst [vmem:[#allocation7 + $0xc0] sm:$0xff] %v2882
    %2937 = vst [vmem:[#allocation7 + $0xc8] sm:$0xff] %v2885
    %2938 = vst [vmem:[#allocation7 + $0xd0] sm:$0xff] %v2890
    %2939 = vst [vmem:[#allocation7 + $0xd8] sm:$0xff] %v2893
    %2940 = vst [vmem:[#allocation7 + $0xe0] sm:$0xff] %v2898
    %2941 = vst [vmem:[#allocation7 + $0xe8] sm:$0xff] %v2901
    %2942 = vst [vmem:[#allocation7 + $0xf0] sm:$0xff] %v2906
    %2943 = vst [vmem:[#allocation7 + $0xf8] sm:$0xff] %v2909
    // Predicated region
    $region34: #{tpu_custom_call.1} parent=1 // pred_check
      _
    $region35: #{tpu_custom_call.1} parent=1 // pred_check_branch
      %2945 = sbr.rel (0) target = $region37
    $region36: #{tpu_custom_call.1} parent=1 // pred_region
      %s2947 = ssub.s32 4096, 4096
      %2948 = vsyncadd [#allocation4], %s2947
      %s2949 = sshll.u32 [#allocation7], 4
      %s2950 = int_to_ptr.vmem [resolvable:$true] %s2949
      %2955 = dma.vmem_to_hbm [thread:$0]  %s2950, 4096, %s6, [#allocation4], 128, 128, 8
    $region37: #{tpu_custom_call.1} parent=1 // pred_fallthru
      _
    // Predicated region
    $region38: #{tpu_custom_call.1} parent=1 // pred_check
      _
    $region39: #{tpu_custom_call.1} parent=1 // pred_check_branch
      %2957 = sbr.rel (0) target = $region41
    $region40: #{tpu_custom_call.1} parent=1 // pred_region
      %2958 = dma.done [#allocation4], 4096
    $region41: #{tpu_custom_call.1} parent=1 // pred_fallthru
      _
    %2959 = vsyncpa [#allocation3], 1
    %2960 = vsyncpa [#allocation6], 1
    %2961 = vsyncpa [#allocation4], 1

</llo_original>
